<compile_context>
chip_gen: v5e
topology: v5e:2x2
jax: 0.10.0
libtpu: 0.0.40
codegen_flags: <defaults>
</compile_context>

<pallas_src>
import functools

import jax
import jax.numpy as jnp
from jax import lax
from jax.experimental import pallas as pl
from jax.experimental.pallas import tpu as pltpu


def _round_up(x, m):
    return ((x + m - 1) // m) * m


def _default_cumsum_method():
    """MXU cumsum on v6e/v7x (big idle MXU); roll-scan on v5e / unknown chips."""
    try:
        kind = jax.devices()[0].device_kind.lower()
    except Exception:
        return "scan"
    if "v5e" in kind or "v5 lite" in kind or "v5lite" in kind:
        return "scan"
    return "mxu"


def _color_approx_kernel(d_ref, sigma_ref, color_ref, out_ref, *, use_mxu_cumsum):
    """d_ref, sigma_ref: (T, N); color_ref: (T, C*N); out_ref: (C, T)."""
    T, N = d_ref.shape
    C = out_ref.shape[0]

    lane = lax.broadcasted_iota(jnp.int32, (T, N), 1)

    # neighbour distances:
    #   delta[i] = d[i+1] - d[i]            for i < N-1
    #   delta[N-1] = |d[N-1] - d[N-2]|
    d = d_ref[...]                                 # (T, N) f32
    d_next = pltpu.roll(d, shift=N - 1, axis=1)    # d_next[:, i] = d[:, (i+1) % N]
    d_prev = pltpu.roll(d, shift=1, axis=1)        # d_prev[:, i] = d[:, (i-1) % N]
    delta = jnp.where(lane < N - 1, d_next - d, jnp.abs(d - d_prev))

    p = sigma_ref[...] * delta                     # sigma*delta, (T, N)

    # Inclusive cumulative sum along lanes.
    if use_mxu_cumsum:
        # cs[t, i] = sum_{j <= i} p[t, j]  via (T,N) x (N,N) upper-triangular ones.
        # Built in-kernel (3 cheap VALU ops on 16 vregs) -- no extra HBM input.
        row = lax.broadcasted_iota(jnp.int32, (N, N), 0)
        col = lax.broadcasted_iota(jnp.int32, (N, N), 1)
        tri = jnp.where(row <= col, 1.0, 0.0).astype(jnp.float32)
        cs = jnp.dot(p, tri, preferred_element_type=jnp.float32,
                     precision=lax.Precision.HIGHEST)
    else:
        # Hillis-Steele log-scan: pltpu.roll = XLU, add/where = VALU.
        cs = p
        s = 1
        while s < N:
            rolled = pltpu.roll(cs, shift=s, axis=1)   # rolled[:, i] = cs[:, i - s]
            cs = cs + jnp.where(lane >= s, rolled, 0.0)
            s *= 2

    # Single-exp transmittance*alpha:
    #   exp(-cum_excl[i]) * (1 - exp(-p[i])) == E[i-1] - E[i],  E[-1] := 1
    # TODO(synk): an expm1-style formulation would help tiny sigma*delta if tighter
    #             relative accuracy is ever required.
    E = jnp.exp(-cs)                               # (T, N)
    E_prev = pltpu.roll(E, shift=1, axis=1)
    w = jnp.where(lane == 0, 1.0, E_prev) - E      # per-sample weights, (T, N)

    # out[c, r] = sum_i w[r, i] * color[r, c*N + i]  -> lane-dense row stores.
    for ch in range(C):
        col_slice = color_ref[:, ch * N:(ch + 1) * N]    # static, lane-aligned for N%128==0
        out_ref[ch, :] = jnp.sum(col_slice * w, axis=-1)


def color_approximation_batched(sampled_distances, volume_density, volume_color,
                                *, ray_tile=512, cumsum_method=None):
    """Batched ColorApproximation.

    sampled_distances: (R, N) f32
    volume_density:    (R, N) f32
    volume_color:      (R, C, N) f32
    Returns (R, C) f32 approximated pixel colours.

    ray_tile: rays per grid step (sweep 512-1024; on v7x keep it small enough that
    the grid has >= 2 steps so both TensorCores are used).
    """
    R, N = sampled_distances.shape
    C = volume_color.shape[1]

    if cumsum_method is None:
        cumsum_method = _default_cumsum_method()
    use_mxu = (cumsum_method == "mxu")

    d = sampled_distances.astype(jnp.float32)
    s = volume_density.astype(jnp.float32)
    # Free reshape (row-major, no copy / no transpose): (R, C, N) -> (R, C*N).
    c = volume_color.astype(jnp.float32).reshape(R, C * N)

    # Tile choice: same number of tiles as ceil(R / ray_tile) but sized to minimize
    # padding.  Single tile only needs a multiple-of-8 sublane count; multi-tile
    # needs a multiple of 128 so the (C, tile) output block stays lane-legal.
    num_tiles = -(-R // ray_tile)
    if num_tiles == 1:
        rt = _round_up(R, 8)
    else:
        rt = _round_up(-(-R // num_tiles), 128)
    R_pad = num_tiles * rt

    if R_pad != R:
        pad = R_pad - R
        d = jnp.pad(d, ((0, pad), (0, 0)))
        s = jnp.pad(s, ((0, pad), (0, 0)))
        c = jnp.pad(c, ((0, pad), (0, 0)))
        # Padded rows are all-zero -> delta=0, p=0, E=1, w=0, colour=0 -> output 0,
        # later sliced away; no inf/NaN can feed back into kept rows.

    # VMEM budget: double-buffered inputs/output + ~6 live (rt, N) f32 temporaries.
    tile_in_bytes = 4 * (2 * rt * N + rt * C * N)
    tile_out_bytes = 4 * C * rt
    temp_bytes = 4 * 8 * rt * N
    vmem_budget = 2 * (tile_in_bytes + tile_out_bytes) + temp_bytes
    # Raise v5e's 16 MiB scoped default if needed; never exceed v7x's 64 MiB physical.
    vmem_limit = int(min(max(2 * vmem_budget, 32 << 20), 64 << 20))

    kern = functools.partial(_color_approx_kernel, use_mxu_cumsum=use_mxu)

    out = pl.pallas_call(
        kern,
        out_shape=jax.ShapeDtypeStruct((C, R_pad), jnp.float32),
        grid_spec=pltpu.PrefetchScalarGridSpec(
            num_scalar_prefetch=0,
            grid=(num_tiles,),
            in_specs=[
                pl.BlockSpec((rt, N), lambda t: (t, 0)),
                pl.BlockSpec((rt, N), lambda t: (t, 0)),
                pl.BlockSpec((rt, C * N), lambda t: (t, 0)),
            ],
            out_specs=pl.BlockSpec((C, rt), lambda t: (0, t)),
        ),
        compiler_params=pltpu.CompilerParams(
            dimension_semantics=("parallel",),   # ray tiles are independent
            vmem_limit_bytes=vmem_limit),
    )(d, s, c)

    return out[:, :R].T                          # (R, C); tiny transpose of (C, R)


def color_approximation(sampled_distances, volume_density, volume_color):
    """Single-ray ColorApproximation.forward (matches the PyTorch module signature).

    sampled_distances: (N,), volume_density: (N,), volume_color: (C, N).
    Returns (C,).
    """
    out = color_approximation_batched(sampled_distances[None],
                                      volume_density[None],
                                      volume_color[None])
    return out[0]


def _reference_batched(d, sigma, color):
    """Pure-JAX reference of the intended module semantics (batched)."""
    delta = jnp.concatenate(
        [d[:, 1:] - d[:, :-1], jnp.abs(d[:, -1:] - d[:, -2:-1])], axis=-1)
    p = delta * sigma
    cs = jnp.cumsum(p, axis=-1)
    transmittance = jnp.concatenate(
        [jnp.ones_like(cs[:, :1]), jnp.exp(-cs[:, :-1])], axis=-1)
    w = transmittance * (1.0 - jnp.exp(-p))
    return jnp.sum(w[:, None, :] * color, axis=-1)   # (R, C)


if __name__ == "__main__":
    key = jax.random.PRNGKey(0)
    k1, k2, k3 = jax.random.split(key, 3)

    R, N, C = 160, 128, 3   # 160 rays, 128 samples, RGB (single-tile, no padding)

    sampled_distances = jnp.sort(
        jax.random.uniform(k1, (R, N), jnp.float32, 0.1, 6.0), axis=-1)
    volume_density = jax.random.uniform(k2, (R, N), jnp.float32, 0.0, 2.0)
    volume_color = jax.random.uniform(k3, (R, C, N), jnp.float32)

    ref = _reference_batched(sampled_distances, volume_density, volume_color)

    # Both cumsum paths (roll-scan for v5e-style targets, MXU matmul for v6e/v7x).
    for method in ("scan", "mxu"):
        out = jax.block_until_ready(
            color_approximation_batched(sampled_distances, volume_density,
                                        volume_color, cumsum_method=method))
        assert out.shape == (R, C), (method, out.shape)
        assert jnp.allclose(out, ref, atol=1e-5, rtol=1e-5), method

    # Multi-tile grid + row-padding path, default (chip-dependent) cumsum method.
    R2 = 300
    d2 = jnp.sort(jax.random.uniform(k1, (R2, N), jnp.float32, 0.1, 6.0), axis=-1)
    s2 = jax.random.uniform(k2, (R2, N), jnp.float32, 0.0, 2.0)
    c2 = jax.random.uniform(k3, (R2, C, N), jnp.float32)
    out2 = jax.block_until_ready(
        color_approximation_batched(d2, s2, c2, ray_tile=128))
    ref2 = _reference_batched(d2, s2, c2)
    assert out2.shape == (R2, C), out2.shape
    assert jnp.allclose(out2, ref2, atol=1e-5, rtol=1e-5)

    # Single-ray path (module's original signature).
    out1 = jax.block_until_ready(
        color_approximation(sampled_distances[0], volume_density[0], volume_color[0]))
    assert out1.shape == (C,), out1.shape
    assert jnp.allclose(out1, ref[0], atol=1e-5, rtol=1e-5)

    print("KERNEL_OK")
</pallas_src>

<mosaic_0001>
module attributes {stable_mosaic.version = 11 : i64} {
  func.func @_color_approx_kernel(%arg0: i32, %arg1: memref<160x128xf32, #tpu.memory_space<vmem>>, %arg2: memref<160x128xf32, #tpu.memory_space<vmem>>, %arg3: memref<160x384xf32, #tpu.memory_space<vmem>>, %arg4: memref<3x160xf32, #tpu.memory_space<vmem>>) attributes {dimension_semantics = [#tpu.dimension_semantics<parallel>], iteration_bounds = array<i64: 1>, scalar_prefetch = 0 : i64, scratch_operands = 0 : i64, tpu.core_type = #tpu.core_type<tc>, window_params = [{transform_indices = @transform_0, window_bounds = array<i64: 160, 128>}, {transform_indices = @transform_1, window_bounds = array<i64: 160, 128>}, {transform_indices = @transform_2, window_bounds = array<i64: 160, 384>}, {transform_indices = @transform_3, window_bounds = array<i64: 3, 160>}]} {
    %0 = tpu.iota {dimensions = array<i32: 1>} : vector<160x128xi32>
    %c0 = arith.constant 0 : index
    %c0_0 = arith.constant 0 : index
    %1 = vector.load %arg1[%c0, %c0_0] : memref<160x128xf32, #tpu.memory_space<vmem>>, vector<160x128xf32>
    %c127_i32 = arith.constant 127 : i32
    %2 = tpu.dynamic_rotate %1 by %c127_i32 dim 1 : vector<160x128xf32>, i32 -> vector<160x128xf32>
    %c1_i32 = arith.constant 1 : i32
    %3 = tpu.dynamic_rotate %1 by %c1_i32 dim 1 : vector<160x128xf32>, i32 -> vector<160x128xf32>
    %c127_i32_1 = arith.constant 127 : i32
    %4 = vector.broadcast %c127_i32_1 : i32 to vector<160x128xi32>
    %5 = arith.cmpi slt, %0, %4 : vector<160x128xi32>
    %6 = arith.subf %2, %1 : vector<160x128xf32>
    %7 = arith.subf %1, %3 : vector<160x128xf32>
    %8 = math.absf %7 : vector<160x128xf32>
    %9 = arith.select %5, %6, %8 : vector<160x128xi1>, vector<160x128xf32>
    %c0_2 = arith.constant 0 : index
    %c0_3 = arith.constant 0 : index
    %10 = vector.load %arg2[%c0_2, %c0_3] : memref<160x128xf32, #tpu.memory_space<vmem>>, vector<160x128xf32>
    %11 = arith.mulf %10, %9 : vector<160x128xf32>
    %c1_i32_4 = arith.constant 1 : i32
    %12 = tpu.dynamic_rotate %11 by %c1_i32_4 dim 1 : vector<160x128xf32>, i32 -> vector<160x128xf32>
    %c1_i32_5 = arith.constant 1 : i32
    %13 = vector.broadcast %c1_i32_5 : i32 to vector<160x128xi32>
    %14 = arith.cmpi sge, %0, %13 : vector<160x128xi32>
    %cst = arith.constant 0.000000e+00 : f32
    %15 = vector.broadcast %cst : f32 to vector<160x128xf32>
    %16 = arith.select %14, %12, %15 : vector<160x128xi1>, vector<160x128xf32>
    %17 = arith.addf %11, %16 : vector<160x128xf32>
    %c2_i32 = arith.constant 2 : i32
    %18 = tpu.dynamic_rotate %17 by %c2_i32 dim 1 : vector<160x128xf32>, i32 -> vector<160x128xf32>
    %c2_i32_6 = arith.constant 2 : i32
    %19 = vector.broadcast %c2_i32_6 : i32 to vector<160x128xi32>
    %20 = arith.cmpi sge, %0, %19 : vector<160x128xi32>
    %cst_7 = arith.constant 0.000000e+00 : f32
    %21 = vector.broadcast %cst_7 : f32 to vector<160x128xf32>
    %22 = arith.select %20, %18, %21 : vector<160x128xi1>, vector<160x128xf32>
    %23 = arith.addf %17, %22 : vector<160x128xf32>
    %c4_i32 = arith.constant 4 : i32
    %24 = tpu.dynamic_rotate %23 by %c4_i32 dim 1 : vector<160x128xf32>, i32 -> vector<160x128xf32>
    %c4_i32_8 = arith.constant 4 : i32
    %25 = vector.broadcast %c4_i32_8 : i32 to vector<160x128xi32>
    %26 = arith.cmpi sge, %0, %25 : vector<160x128xi32>
    %cst_9 = arith.constant 0.000000e+00 : f32
    %27 = vector.broadcast %cst_9 : f32 to vector<160x128xf32>
    %28 = arith.select %26, %24, %27 : vector<160x128xi1>, vector<160x128xf32>
    %29 = arith.addf %23, %28 : vector<160x128xf32>
    %c8_i32 = arith.constant 8 : i32
    %30 = tpu.dynamic_rotate %29 by %c8_i32 dim 1 : vector<160x128xf32>, i32 -> vector<160x128xf32>
    %c8_i32_10 = arith.constant 8 : i32
    %31 = vector.broadcast %c8_i32_10 : i32 to vector<160x128xi32>
    %32 = arith.cmpi sge, %0, %31 : vector<160x128xi32>
    %cst_11 = arith.constant 0.000000e+00 : f32
    %33 = vector.broadcast %cst_11 : f32 to vector<160x128xf32>
    %34 = arith.select %32, %30, %33 : vector<160x128xi1>, vector<160x128xf32>
    %35 = arith.addf %29, %34 : vector<160x128xf32>
    %c16_i32 = arith.constant 16 : i32
    %36 = tpu.dynamic_rotate %35 by %c16_i32 dim 1 : vector<160x128xf32>, i32 -> vector<160x128xf32>
    %c16_i32_12 = arith.constant 16 : i32
    %37 = vector.broadcast %c16_i32_12 : i32 to vector<160x128xi32>
    %38 = arith.cmpi sge, %0, %37 : vector<160x128xi32>
    %cst_13 = arith.constant 0.000000e+00 : f32
    %39 = vector.broadcast %cst_13 : f32 to vector<160x128xf32>
    %40 = arith.select %38, %36, %39 : vector<160x128xi1>, vector<160x128xf32>
    %41 = arith.addf %35, %40 : vector<160x128xf32>
    %c32_i32 = arith.constant 32 : i32
    %42 = tpu.dynamic_rotate %41 by %c32_i32 dim 1 : vector<160x128xf32>, i32 -> vector<160x128xf32>
    %c32_i32_14 = arith.constant 32 : i32
    %43 = vector.broadcast %c32_i32_14 : i32 to vector<160x128xi32>
    %44 = arith.cmpi sge, %0, %43 : vector<160x128xi32>
    %cst_15 = arith.constant 0.000000e+00 : f32
    %45 = vector.broadcast %cst_15 : f32 to vector<160x128xf32>
    %46 = arith.select %44, %42, %45 : vector<160x128xi1>, vector<160x128xf32>
    %47 = arith.addf %41, %46 : vector<160x128xf32>
    %c64_i32 = arith.constant 64 : i32
    %48 = tpu.dynamic_rotate %47 by %c64_i32 dim 1 : vector<160x128xf32>, i32 -> vector<160x128xf32>
    %c64_i32_16 = arith.constant 64 : i32
    %49 = vector.broadcast %c64_i32_16 : i32 to vector<160x128xi32>
    %50 = arith.cmpi sge, %0, %49 : vector<160x128xi32>
    %cst_17 = arith.constant 0.000000e+00 : f32
    %51 = vector.broadcast %cst_17 : f32 to vector<160x128xf32>
    %52 = arith.select %50, %48, %51 : vector<160x128xi1>, vector<160x128xf32>
    %53 = arith.addf %47, %52 : vector<160x128xf32>
    %cst_18 = arith.constant 0.000000e+00 : f32
    %54 = vector.broadcast %cst_18 : f32 to vector<160x128xf32>
    %55 = arith.subf %54, %53 : vector<160x128xf32>
    %56 = math.exp %55 : vector<160x128xf32>
    %c1_i32_19 = arith.constant 1 : i32
    %57 = tpu.dynamic_rotate %56 by %c1_i32_19 dim 1 : vector<160x128xf32>, i32 -> vector<160x128xf32>
    %c0_i32 = arith.constant 0 : i32
    %58 = vector.broadcast %c0_i32 : i32 to vector<160x128xi32>
    %59 = arith.cmpi eq, %0, %58 : vector<160x128xi32>
    %cst_20 = arith.constant 1.000000e+00 : f32
    %60 = vector.broadcast %cst_20 : f32 to vector<160x128xf32>
    %61 = arith.select %59, %60, %57 : vector<160x128xi1>, vector<160x128xf32>
    %62 = arith.subf %61, %56 : vector<160x128xf32>
    %c0_21 = arith.constant 0 : index
    %c0_22 = arith.constant 0 : index
    %63 = vector.load %arg3[%c0_21, %c0_22] : memref<160x384xf32, #tpu.memory_space<vmem>>, vector<160x128xf32>
    %64 = arith.mulf %63, %62 : vector<160x128xf32>
    %cst_23 = arith.constant dense<0.000000e+00> : vector<160xf32>
    %65 = vector.multi_reduction <add>, %64, %cst_23 [1] : vector<160x128xf32> to vector<160xf32>
    %c0_24 = arith.constant 0 : index
    %c0_25 = arith.constant 0 : index
    %66 = vector.load %arg4[%c0_24, %c0_25] : memref<3x160xf32, #tpu.memory_space<vmem>>, vector<1x160xf32>
    %67 = vector.shape_cast %66 : vector<1x160xf32> to vector<160xf32>
    %68 = vector.shape_cast %65 : vector<160xf32> to vector<1x160xf32>
    tpu.vector_store %arg4[%c0_24, %c0_25], %68 {strides = array<i32>} : memref<3x160xf32, #tpu.memory_space<vmem>>, vector<1x160xf32>,
    %c0_26 = arith.constant 0 : index
    %c128 = arith.constant 128 : index
    %69 = vector.load %arg3[%c0_26, %c128] : memref<160x384xf32, #tpu.memory_space<vmem>>, vector<160x128xf32>
    %70 = arith.mulf %69, %62 : vector<160x128xf32>
    %cst_27 = arith.constant dense<0.000000e+00> : vector<160xf32>
    %71 = vector.multi_reduction <add>, %70, %cst_27 [1] : vector<160x128xf32> to vector<160xf32>
    %c1 = arith.constant 1 : index
    %c0_28 = arith.constant 0 : index
    %72 = vector.load %arg4[%c1, %c0_28] : memref<3x160xf32, #tpu.memory_space<vmem>>, vector<1x160xf32>
    %73 = vector.shape_cast %72 : vector<1x160xf32> to vector<160xf32>
    %74 = vector.shape_cast %71 : vector<160xf32> to vector<1x160xf32>
    tpu.vector_store %arg4[%c1, %c0_28], %74 {strides = array<i32>} : memref<3x160xf32, #tpu.memory_space<vmem>>, vector<1x160xf32>,
    %c0_29 = arith.constant 0 : index
    %c256 = arith.constant 256 : index
    %75 = vector.load %arg3[%c0_29, %c256] : memref<160x384xf32, #tpu.memory_space<vmem>>, vector<160x128xf32>
    %76 = arith.mulf %75, %62 : vector<160x128xf32>
    %cst_30 = arith.constant dense<0.000000e+00> : vector<160xf32>
    %77 = vector.multi_reduction <add>, %76, %cst_30 [1] : vector<160x128xf32> to vector<160xf32>
    %c2 = arith.constant 2 : index
    %c0_31 = arith.constant 0 : index
    %78 = vector.load %arg4[%c2, %c0_31] : memref<3x160xf32, #tpu.memory_space<vmem>>, vector<1x160xf32>
    %79 = vector.shape_cast %78 : vector<1x160xf32> to vector<160xf32>
    %80 = vector.shape_cast %77 : vector<160xf32> to vector<1x160xf32>
    tpu.vector_store %arg4[%c2, %c0_31], %80 {strides = array<i32>} : memref<3x160xf32, #tpu.memory_space<vmem>>, vector<1x160xf32>,
    return
  }
  func.func @transform_0(%arg0: i32) -> (i32, i32) {
    %c0_i32 = arith.constant 0 : i32
    %c0_i32_0 = arith.constant 0 : i32
    return %arg0, %c0_i32 : i32, i32
  }
  func.func @transform_1(%arg0: i32) -> (i32, i32) {
    %c0_i32 = arith.constant 0 : i32
    %c0_i32_0 = arith.constant 0 : i32
    return %arg0, %c0_i32 : i32, i32
  }
  func.func @transform_2(%arg0: i32) -> (i32, i32) {
    %c0_i32 = arith.constant 0 : i32
    %c0_i32_0 = arith.constant 0 : i32
    return %arg0, %c0_i32 : i32, i32
  }
  func.func @transform_3(%arg0: i32) -> (i32, i32) {
    %c0_i32 = arith.constant 0 : i32
    %c0_i32_0 = arith.constant 0 : i32
    return %c0_i32, %arg0 : i32, i32
  }
}

</mosaic_0001>

<llo_original>
// kernel: tpu_custom_call.1
$region0: #{tpu_custom_call.1}
  #allocation0 [shape = 'u32[]', space=smem, size = 0x4, offset = 0x4, fixed_abs, tag = 'smem constant byte address 0x4 - core index']
  #allocation1 [shape = 'u32[72,128]{1,0:T(1,128)}', space=vmem, size = 0x9000, scoped, tag = 'internal scratch']
  %s0 = inlined_call_operand.hbm [shape: f32[160,128], index: 0, kind: input, shape index: {}]
  %s1 = inlined_call_operand.hbm [shape: f32[160,128], index: 1, kind: input, shape index: {}]
  %s2 = inlined_call_operand.hbm [shape: f32[160,384], index: 2, kind: input, shape index: {}]
  %s3 = inlined_call_operand.hbm [shape: f32[3,160], index: 3, kind: output, shape index: {}]
  %s4 = sld [smem:[#allocation0]]
  $region34: #{tpu_custom_call.1} parent=0
    _
  %s6 = ssub.s32 1, %s4
  %s7 = scalar_select 0, %s6, %s4
  $region1: #{tpu_custom_call.1} parent=0
    #allocation2 [shape = 'u8[81920]{0}', space=vmem, size = 0x14000, scoped, tag = 'input window, operand 0, single buffered']
    #allocation3 [shape = 's32[1]{0}', space=sflag, size = 0x4, scoped, tag = 'scoped memory for tpu_custom_call.1']
    #allocation4 [shape = 's32[1]{0}', space=sflag, size = 0x4, scoped, tag = 'scoped memory for tpu_custom_call.1']
    #allocation5 [shape = 'u8[81920]{0}', space=vmem, size = 0x14000, scoped, tag = 'input window, operand 1, single buffered']
    #allocation6 [shape = 's32[1]{0}', space=sflag, size = 0x4, scoped, tag = 'scoped memory for tpu_custom_call.1']
    #allocation7 [shape = 'u8[245760]{0}', space=vmem, size = 0x3c000, scoped, tag = 'input window, operand 2, single buffered']
    #allocation8 [shape = 'u8[4096]{0}', space=vmem, size = 0x1000, scoped, tag = 'output window, operand 0, single buffered']
    %8 = vsyncpa [#allocation3], 0
    %9 = vsyncpa [#allocation6], 0
    %10 = vsyncpa [#allocation4], 0
    // Predicated region
    $region2: #{tpu_custom_call.1} parent=1 // pred_check
      _
    $region3: #{tpu_custom_call.1} parent=1 // pred_check_branch
      %12 = sbr.rel (0) target = $region5
    $region4: #{tpu_custom_call.1} parent=1 // pred_region
      %14 = vsyncadd [#allocation3], 0
      %s15 = sshll.u32 %s0, 4
      %s16 = int_to_ptr.hbm [resolvable:$true] %s15
      %s17 = sshll.u32 [#allocation2], 4
      %s18 = int_to_ptr.vmem [resolvable:$true] %s17
      %23 = dma.hbm_to_vmem [thread:$0]  %s16, 2560, %s18, [#allocation3], 128, 128, 8
    $region5: #{tpu_custom_call.1} parent=1 // pred_fallthru
      _
    // Predicated region
    $region6: #{tpu_custom_call.1} parent=1 // pred_check
      _
    $region7: #{tpu_custom_call.1} parent=1 // pred_check_branch
      %25 = sbr.rel (0) target = $region9
    $region8: #{tpu_custom_call.1} parent=1 // pred_region
      %27 = vsyncadd [#allocation6], 0
      %s28 = sshll.u32 %s1, 4
      %s29 = int_to_ptr.hbm [resolvable:$true] %s28
      %s30 = sshll.u32 [#allocation5], 4
      %s31 = int_to_ptr.vmem [resolvable:$true] %s30
      %36 = dma.hbm_to_vmem [thread:$0]  %s29, 2560, %s31, [#allocation6], 128, 128, 8
    $region9: #{tpu_custom_call.1} parent=1 // pred_fallthru
      _
    // Predicated region
    $region10: #{tpu_custom_call.1} parent=1 // pred_check
      _
    $region11: #{tpu_custom_call.1} parent=1 // pred_check_branch
      %38 = sbr.rel (0) target = $region13
    $region12: #{tpu_custom_call.1} parent=1 // pred_region
      %40 = vsyncadd [#allocation6], 0
      %s41 = sshll.u32 %s2, 4
      %s42 = int_to_ptr.hbm [resolvable:$true] %s41
      %s43 = sshll.u32 [#allocation7], 4
      %s44 = int_to_ptr.vmem [resolvable:$true] %s43
      %49 = dma.hbm_to_vmem [thread:$0]  %s42, 7680, %s44, [#allocation6], 384, 384, 24
    $region13: #{tpu_custom_call.1} parent=1 // pred_fallthru
      _
    // Predicated region
    $region14: #{tpu_custom_call.1} parent=1 // pred_check
      _
    $region15: #{tpu_custom_call.1} parent=1 // pred_check_branch
      %51 = sbr.rel (0) target = $region17
    $region16: #{tpu_custom_call.1} parent=1 // pred_region
      %53 = dma.done [#allocation3], 2560
    $region17: #{tpu_custom_call.1} parent=1 // pred_fallthru
      _
    // Predicated region
    $region18: #{tpu_custom_call.1} parent=1 // pred_check
      _
    $region19: #{tpu_custom_call.1} parent=1 // pred_check_branch
      %55 = sbr.rel (0) target = $region21
    $region20: #{tpu_custom_call.1} parent=1 // pred_region
      %57 = dma.done [#allocation6], 2560
    $region21: #{tpu_custom_call.1} parent=1 // pred_fallthru
      _
    // Predicated region
    $region22: #{tpu_custom_call.1} parent=1 // pred_check
      _
    $region23: #{tpu_custom_call.1} parent=1 // pred_check_branch
      %59 = sbr.rel (0) target = $region25
    $region24: #{tpu_custom_call.1} parent=1 // pred_region
      %61 = dma.done [#allocation6], 7680
    $region25: #{tpu_custom_call.1} parent=1 // pred_fallthru
      _
    %v62 = vlaneseq
    %v63 = vand.u32 %v62, 127
    %v64 = vld [vmem:[#allocation2] sm:$0xff]
    %v65 = vld [vmem:[#allocation2 + $0x8] sm:$0xff]
    %v66 = vld [vmem:[#allocation2 + $0x10] sm:$0xff]
    %v67 = vld [vmem:[#allocation2 + $0x18] sm:$0xff]
    %v68 = vld [vmem:[#allocation2 + $0x20] sm:$0xff]
    %v69 = vld [vmem:[#allocation2 + $0x28] sm:$0xff]
    %v70 = vld [vmem:[#allocation2 + $0x30] sm:$0xff]
    %v71 = vld [vmem:[#allocation2 + $0x38] sm:$0xff]
    %v72 = vld [vmem:[#allocation2 + $0x40] sm:$0xff]
    %v73 = vld [vmem:[#allocation2 + $0x48] sm:$0xff]
    %v74 = vld [vmem:[#allocation2 + $0x50] sm:$0xff]
    %v75 = vld [vmem:[#allocation2 + $0x58] sm:$0xff]
    %v76 = vld [vmem:[#allocation2 + $0x60] sm:$0xff]
    %v77 = vld [vmem:[#allocation2 + $0x68] sm:$0xff]
    %v78 = vld [vmem:[#allocation2 + $0x70] sm:$0xff]
    %v79 = vld [vmem:[#allocation2 + $0x78] sm:$0xff]
    %v80 = vld [vmem:[#allocation2 + $0x80] sm:$0xff]
    %v81 = vld [vmem:[#allocation2 + $0x88] sm:$0xff]
    %v82 = vld [vmem:[#allocation2 + $0x90] sm:$0xff]
    %v83 = vld [vmem:[#allocation2 + $0x98] sm:$0xff]
    %84 = vrot.lane.b32.xlu0 %v64, 127
    %v85 = vpop.permute.xlu0 %84
    %86 = vrot.lane.b32.xlu0 %v65, 127
    %v87 = vpop.permute.xlu0 %86
    %88 = vrot.lane.b32.xlu0 %v66, 127
    %v89 = vpop.permute.xlu0 %88
    %90 = vrot.lane.b32.xlu0 %v67, 127
    %v91 = vpop.permute.xlu0 %90
    %92 = vrot.lane.b32.xlu0 %v68, 127
    %v93 = vpop.permute.xlu0 %92
    %94 = vrot.lane.b32.xlu0 %v69, 127
    %v95 = vpop.permute.xlu0 %94
    %96 = vrot.lane.b32.xlu0 %v70, 127
    %v97 = vpop.permute.xlu0 %96
    %98 = vrot.lane.b32.xlu0 %v71, 127
    %v99 = vpop.permute.xlu0 %98
    %100 = vrot.lane.b32.xlu0 %v72, 127
    %v101 = vpop.permute.xlu0 %100
    %102 = vrot.lane.b32.xlu0 %v73, 127
    %v103 = vpop.permute.xlu0 %102
    %104 = vrot.lane.b32.xlu0 %v74, 127
    %v105 = vpop.permute.xlu0 %104
    %106 = vrot.lane.b32.xlu0 %v75, 127
    %v107 = vpop.permute.xlu0 %106
    %108 = vrot.lane.b32.xlu0 %v76, 127
    %v109 = vpop.permute.xlu0 %108
    %110 = vrot.lane.b32.xlu0 %v77, 127
    %v111 = vpop.permute.xlu0 %110
    %112 = vrot.lane.b32.xlu0 %v78, 127
    %v113 = vpop.permute.xlu0 %112
    %114 = vrot.lane.b32.xlu0 %v79, 127
    %v115 = vpop.permute.xlu0 %114
    %116 = vrot.lane.b32.xlu0 %v80, 127
    %v117 = vpop.permute.xlu0 %116
    %118 = vrot.lane.b32.xlu0 %v81, 127
    %v119 = vpop.permute.xlu0 %118
    %120 = vrot.lane.b32.xlu0 %v82, 127
    %v121 = vpop.permute.xlu0 %120
    %122 = vrot.lane.b32.xlu0 %v83, 127
    %v123 = vpop.permute.xlu0 %122
    %124 = vrot.lane.b32.xlu0 %v64, 1
    %v125 = vpop.permute.xlu0 %124
    %126 = vrot.lane.b32.xlu0 %v65, 1
    %v127 = vpop.permute.xlu0 %126
    %128 = vrot.lane.b32.xlu0 %v66, 1
    %v129 = vpop.permute.xlu0 %128
    %130 = vrot.lane.b32.xlu0 %v67, 1
    %v131 = vpop.permute.xlu0 %130
    %132 = vrot.lane.b32.xlu0 %v68, 1
    %v133 = vpop.permute.xlu0 %132
    %134 = vrot.lane.b32.xlu0 %v69, 1
    %v135 = vpop.permute.xlu0 %134
    %136 = vrot.lane.b32.xlu0 %v70, 1
    %v137 = vpop.permute.xlu0 %136
    %138 = vrot.lane.b32.xlu0 %v71, 1
    %v139 = vpop.permute.xlu0 %138
    %140 = vrot.lane.b32.xlu0 %v72, 1
    %v141 = vpop.permute.xlu0 %140
    %142 = vrot.lane.b32.xlu0 %v73, 1
    %v143 = vpop.permute.xlu0 %142
    %144 = vrot.lane.b32.xlu0 %v74, 1
    %v145 = vpop.permute.xlu0 %144
    %146 = vrot.lane.b32.xlu0 %v75, 1
    %v147 = vpop.permute.xlu0 %146
    %148 = vrot.lane.b32.xlu0 %v76, 1
    %v149 = vpop.permute.xlu0 %148
    %150 = vrot.lane.b32.xlu0 %v77, 1
    %v151 = vpop.permute.xlu0 %150
    %152 = vrot.lane.b32.xlu0 %v78, 1
    %v153 = vpop.permute.xlu0 %152
    %154 = vrot.lane.b32.xlu0 %v79, 1
    %v155 = vpop.permute.xlu0 %154
    %156 = vrot.lane.b32.xlu0 %v80, 1
    %v157 = vpop.permute.xlu0 %156
    %158 = vrot.lane.b32.xlu0 %v81, 1
    %v159 = vpop.permute.xlu0 %158
    %160 = vrot.lane.b32.xlu0 %v82, 1
    %v161 = vpop.permute.xlu0 %160
    %162 = vrot.lane.b32.xlu0 %v83, 1
    %v163 = vpop.permute.xlu0 %162
    %vm164 = vcmp.lt.s32.totalorder %v63, 127
    %v165 = vsub.f32 %v85, %v64
    %v166 = vsub.f32 %v87, %v65
    %v167 = vsub.f32 %v89, %v66
    %v168 = vsub.f32 %v91, %v67
    %v169 = vsub.f32 %v93, %v68
    %v170 = vsub.f32 %v95, %v69
    %v171 = vsub.f32 %v97, %v70
    %v172 = vsub.f32 %v99, %v71
    %v173 = vsub.f32 %v101, %v72
    %v174 = vsub.f32 %v103, %v73
    %v175 = vsub.f32 %v105, %v74
    %v176 = vsub.f32 %v107, %v75
    %v177 = vsub.f32 %v109, %v76
    %v178 = vsub.f32 %v111, %v77
    %v179 = vsub.f32 %v113, %v78
    %v180 = vsub.f32 %v115, %v79
    %v181 = vsub.f32 %v117, %v80
    %v182 = vsub.f32 %v119, %v81
    %v183 = vsub.f32 %v121, %v82
    %v184 = vsub.f32 %v123, %v83
    %v185 = vsub.f32 %v64, %v125
    %v186 = vsub.f32 %v65, %v127
    %v187 = vsub.f32 %v66, %v129
    %v188 = vsub.f32 %v67, %v131
    %v189 = vsub.f32 %v68, %v133
    %v190 = vsub.f32 %v69, %v135
    %v191 = vsub.f32 %v70, %v137
    %v192 = vsub.f32 %v71, %v139
    %v193 = vsub.f32 %v72, %v141
    %v194 = vsub.f32 %v73, %v143
    %v195 = vsub.f32 %v74, %v145
    %v196 = vsub.f32 %v75, %v147
    %v197 = vsub.f32 %v76, %v149
    %v198 = vsub.f32 %v77, %v151
    %v199 = vsub.f32 %v78, %v153
    %v200 = vsub.f32 %v79, %v155
    %v201 = vsub.f32 %v80, %v157
    %v202 = vsub.f32 %v81, %v159
    %v203 = vsub.f32 %v82, %v161
    %v204 = vsub.f32 %v83, %v163
    %v205 = vand.u32 2147483647, %v185
    %v206 = vand.u32 2147483647, %v186
    %v207 = vand.u32 2147483647, %v187
    %v208 = vand.u32 2147483647, %v188
    %v209 = vand.u32 2147483647, %v189
    %v210 = vand.u32 2147483647, %v190
    %v211 = vand.u32 2147483647, %v191
    %v212 = vand.u32 2147483647, %v192
    %v213 = vand.u32 2147483647, %v193
    %v214 = vand.u32 2147483647, %v194
    %v215 = vand.u32 2147483647, %v195
    %v216 = vand.u32 2147483647, %v196
    %v217 = vand.u32 2147483647, %v197
    %v218 = vand.u32 2147483647, %v198
    %v219 = vand.u32 2147483647, %v199
    %v220 = vand.u32 2147483647, %v200
    %v221 = vand.u32 2147483647, %v201
    %v222 = vand.u32 2147483647, %v202
    %v223 = vand.u32 2147483647, %v203
    %v224 = vand.u32 2147483647, %v204
    %v225 = vsel %vm164, %v165, %v205
    %v226 = vsel %vm164, %v166, %v206
    %v227 = vsel %vm164, %v167, %v207
    %v228 = vsel %vm164, %v168, %v208
    %v229 = vsel %vm164, %v169, %v209
    %v230 = vsel %vm164, %v170, %v210
    %v231 = vsel %vm164, %v171, %v211
    %v232 = vsel %vm164, %v172, %v212
    %v233 = vsel %vm164, %v173, %v213
    %v234 = vsel %vm164, %v174, %v214
    %v235 = vsel %vm164, %v175, %v215
    %v236 = vsel %vm164, %v176, %v216
    %v237 = vsel %vm164, %v177, %v217
    %v238 = vsel %vm164, %v178, %v218
    %v239 = vsel %vm164, %v179, %v219
    %v240 = vsel %vm164, %v180, %v220
    %v241 = vsel %vm164, %v181, %v221
    %v242 = vsel %vm164, %v182, %v222
    %v243 = vsel %vm164, %v183, %v223
    %v244 = vsel %vm164, %v184, %v224
    %v245 = vld [vmem:[#allocation5] sm:$0xff]
    %v246 = vld [vmem:[#allocation5 + $0x8] sm:$0xff]
    %v247 = vld [vmem:[#allocation5 + $0x10] sm:$0xff]
    %v248 = vld [vmem:[#allocation5 + $0x18] sm:$0xff]
    %v249 = vld [vmem:[#allocation5 + $0x20] sm:$0xff]
    %v250 = vld [vmem:[#allocation5 + $0x28] sm:$0xff]
    %v251 = vld [vmem:[#allocation5 + $0x30] sm:$0xff]
    %v252 = vld [vmem:[#allocation5 + $0x38] sm:$0xff]
    %v253 = vld [vmem:[#allocation5 + $0x40] sm:$0xff]
    %v254 = vld [vmem:[#allocation5 + $0x48] sm:$0xff]
    %v255 = vld [vmem:[#allocation5 + $0x50] sm:$0xff]
    %v256 = vld [vmem:[#allocation5 + $0x58] sm:$0xff]
    %v257 = vld [vmem:[#allocation5 + $0x60] sm:$0xff]
    %v258 = vld [vmem:[#allocation5 + $0x68] sm:$0xff]
    %v259 = vld [vmem:[#allocation5 + $0x70] sm:$0xff]
    %v260 = vld [vmem:[#allocation5 + $0x78] sm:$0xff]
    %v261 = vld [vmem:[#allocation5 + $0x80] sm:$0xff]
    %v262 = vld [vmem:[#allocation5 + $0x88] sm:$0xff]
    %v263 = vld [vmem:[#allocation5 + $0x90] sm:$0xff]
    %v264 = vld [vmem:[#allocation5 + $0x98] sm:$0xff]
    %v265 = vmul.f32 %v245, %v225
    %v266 = vmul.f32 %v246, %v226
    %v267 = vmul.f32 %v247, %v227
    %v268 = vmul.f32 %v248, %v228
    %v269 = vmul.f32 %v249, %v229
    %v270 = vmul.f32 %v250, %v230
    %v271 = vmul.f32 %v251, %v231
    %v272 = vmul.f32 %v252, %v232
    %v273 = vmul.f32 %v253, %v233
    %v274 = vmul.f32 %v254, %v234
    %v275 = vmul.f32 %v255, %v235
    %v276 = vmul.f32 %v256, %v236
    %v277 = vmul.f32 %v257, %v237
    %v278 = vmul.f32 %v258, %v238
    %v279 = vmul.f32 %v259, %v239
    %v280 = vmul.f32 %v260, %v240
    %v281 = vmul.f32 %v261, %v241
    %v282 = vmul.f32 %v262, %v242
    %v283 = vmul.f32 %v263, %v243
    %v284 = vmul.f32 %v264, %v244
    %285 = vrot.lane.b32.xlu0 %v265, 1
    %v286 = vpop.permute.xlu0 %285
    %287 = vrot.lane.b32.xlu0 %v266, 1
    %v288 = vpop.permute.xlu0 %287
    %289 = vrot.lane.b32.xlu0 %v267, 1
    %v290 = vpop.permute.xlu0 %289
    %291 = vrot.lane.b32.xlu0 %v268, 1
    %v292 = vpop.permute.xlu0 %291
    %293 = vrot.lane.b32.xlu0 %v269, 1
    %v294 = vpop.permute.xlu0 %293
    %295 = vrot.lane.b32.xlu0 %v270, 1
    %v296 = vpop.permute.xlu0 %295
    %297 = vrot.lane.b32.xlu0 %v271, 1
    %v298 = vpop.permute.xlu0 %297
    %299 = vrot.lane.b32.xlu0 %v272, 1
    %v300 = vpop.permute.xlu0 %299
    %301 = vrot.lane.b32.xlu0 %v273, 1
    %v302 = vpop.permute.xlu0 %301
    %303 = vrot.lane.b32.xlu0 %v274, 1
    %v304 = vpop.permute.xlu0 %303
    %305 = vrot.lane.b32.xlu0 %v275, 1
    %v306 = vpop.permute.xlu0 %305
    %307 = vrot.lane.b32.xlu0 %v276, 1
    %v308 = vpop.permute.xlu0 %307
    %309 = vrot.lane.b32.xlu0 %v277, 1
    %v310 = vpop.permute.xlu0 %309
    %311 = vrot.lane.b32.xlu0 %v278, 1
    %v312 = vpop.permute.xlu0 %311
    %313 = vrot.lane.b32.xlu0 %v279, 1
    %v314 = vpop.permute.xlu0 %313
    %315 = vrot.lane.b32.xlu0 %v280, 1
    %v316 = vpop.permute.xlu0 %315
    %317 = vrot.lane.b32.xlu0 %v281, 1
    %v318 = vpop.permute.xlu0 %317
    %319 = vrot.lane.b32.xlu0 %v282, 1
    %v320 = vpop.permute.xlu0 %319
    %321 = vrot.lane.b32.xlu0 %v283, 1
    %v322 = vpop.permute.xlu0 %321
    %323 = vrot.lane.b32.xlu0 %v284, 1
    %v324 = vpop.permute.xlu0 %323
    %vm325 = vcmp.ge.s32.totalorder %v63, 1
    %v326 = vsel %vm325, %v286, 0.0
    %v327 = vsel %vm325, %v288, 0.0
    %v328 = vsel %vm325, %v290, 0.0
    %v329 = vsel %vm325, %v292, 0.0
    %v330 = vsel %vm325, %v294, 0.0
    %v331 = vsel %vm325, %v296, 0.0
    %v332 = vsel %vm325, %v298, 0.0
    %v333 = vsel %vm325, %v300, 0.0
    %v334 = vsel %vm325, %v302, 0.0
    %v335 = vsel %vm325, %v304, 0.0
    %v336 = vsel %vm325, %v306, 0.0
    %v337 = vsel %vm325, %v308, 0.0
    %v338 = vsel %vm325, %v310, 0.0
    %v339 = vsel %vm325, %v312, 0.0
    %v340 = vsel %vm325, %v314, 0.0
    %v341 = vsel %vm325, %v316, 0.0
    %v342 = vsel %vm325, %v318, 0.0
    %v343 = vsel %vm325, %v320, 0.0
    %v344 = vsel %vm325, %v322, 0.0
    %v345 = vsel %vm325, %v324, 0.0
    %v346 = vadd.f32 %v265, %v326
    %v347 = vadd.f32 %v266, %v327
    %v348 = vadd.f32 %v267, %v328
    %v349 = vadd.f32 %v268, %v329
    %v350 = vadd.f32 %v269, %v330
    %v351 = vadd.f32 %v270, %v331
    %v352 = vadd.f32 %v271, %v332
    %v353 = vadd.f32 %v272, %v333
    %v354 = vadd.f32 %v273, %v334
    %v355 = vadd.f32 %v274, %v335
    %v356 = vadd.f32 %v275, %v336
    %v357 = vadd.f32 %v276, %v337
    %v358 = vadd.f32 %v277, %v338
    %v359 = vadd.f32 %v278, %v339
    %v360 = vadd.f32 %v279, %v340
    %v361 = vadd.f32 %v280, %v341
    %v362 = vadd.f32 %v281, %v342
    %v363 = vadd.f32 %v282, %v343
    %v364 = vadd.f32 %v283, %v344
    %v365 = vadd.f32 %v284, %v345
    %366 = vrot.lane.b32.xlu0 %v346, 2
    %v367 = vpop.permute.xlu0 %366
    %368 = vrot.lane.b32.xlu0 %v347, 2
    %v369 = vpop.permute.xlu0 %368
    %370 = vrot.lane.b32.xlu0 %v348, 2
    %v371 = vpop.permute.xlu0 %370
    %372 = vrot.lane.b32.xlu0 %v349, 2
    %v373 = vpop.permute.xlu0 %372
    %374 = vrot.lane.b32.xlu0 %v350, 2
    %v375 = vpop.permute.xlu0 %374
    %376 = vrot.lane.b32.xlu0 %v351, 2
    %v377 = vpop.permute.xlu0 %376
    %378 = vrot.lane.b32.xlu0 %v352, 2
    %v379 = vpop.permute.xlu0 %378
    %380 = vrot.lane.b32.xlu0 %v353, 2
    %v381 = vpop.permute.xlu0 %380
    %382 = vrot.lane.b32.xlu0 %v354, 2
    %v383 = vpop.permute.xlu0 %382
    %384 = vrot.lane.b32.xlu0 %v355, 2
    %v385 = vpop.permute.xlu0 %384
    %386 = vrot.lane.b32.xlu0 %v356, 2
    %v387 = vpop.permute.xlu0 %386
    %388 = vrot.lane.b32.xlu0 %v357, 2
    %v389 = vpop.permute.xlu0 %388
    %390 = vrot.lane.b32.xlu0 %v358, 2
    %v391 = vpop.permute.xlu0 %390
    %392 = vrot.lane.b32.xlu0 %v359, 2
    %v393 = vpop.permute.xlu0 %392
    %394 = vrot.lane.b32.xlu0 %v360, 2
    %v395 = vpop.permute.xlu0 %394
    %396 = vrot.lane.b32.xlu0 %v361, 2
    %v397 = vpop.permute.xlu0 %396
    %398 = vrot.lane.b32.xlu0 %v362, 2
    %v399 = vpop.permute.xlu0 %398
    %400 = vrot.lane.b32.xlu0 %v363, 2
    %v401 = vpop.permute.xlu0 %400
    %402 = vrot.lane.b32.xlu0 %v364, 2
    %v403 = vpop.permute.xlu0 %402
    %404 = vrot.lane.b32.xlu0 %v365, 2
    %v405 = vpop.permute.xlu0 %404
    %vm406 = vcmp.ge.s32.totalorder %v63, 2
    %v407 = vsel %vm406, %v367, 0.0
    %v408 = vsel %vm406, %v369, 0.0
    %v409 = vsel %vm406, %v371, 0.0
    %v410 = vsel %vm406, %v373, 0.0
    %v411 = vsel %vm406, %v375, 0.0
    %v412 = vsel %vm406, %v377, 0.0
    %v413 = vsel %vm406, %v379, 0.0
    %v414 = vsel %vm406, %v381, 0.0
    %v415 = vsel %vm406, %v383, 0.0
    %v416 = vsel %vm406, %v385, 0.0
    %v417 = vsel %vm406, %v387, 0.0
    %v418 = vsel %vm406, %v389, 0.0
    %v419 = vsel %vm406, %v391, 0.0
    %v420 = vsel %vm406, %v393, 0.0
    %v421 = vsel %vm406, %v395, 0.0
    %v422 = vsel %vm406, %v397, 0.0
    %v423 = vsel %vm406, %v399, 0.0
    %v424 = vsel %vm406, %v401, 0.0
    %v425 = vsel %vm406, %v403, 0.0
    %v426 = vsel %vm406, %v405, 0.0
    %v427 = vadd.f32 %v346, %v407
    %v428 = vadd.f32 %v347, %v408
    %v429 = vadd.f32 %v348, %v409
    %v430 = vadd.f32 %v349, %v410
    %v431 = vadd.f32 %v350, %v411
    %v432 = vadd.f32 %v351, %v412
    %v433 = vadd.f32 %v352, %v413
    %v434 = vadd.f32 %v353, %v414
    %v435 = vadd.f32 %v354, %v415
    %v436 = vadd.f32 %v355, %v416
    %v437 = vadd.f32 %v356, %v417
    %v438 = vadd.f32 %v357, %v418
    %v439 = vadd.f32 %v358, %v419
    %v440 = vadd.f32 %v359, %v420
    %v441 = vadd.f32 %v360, %v421
    %v442 = vadd.f32 %v361, %v422
    %v443 = vadd.f32 %v362, %v423
    %v444 = vadd.f32 %v363, %v424
    %v445 = vadd.f32 %v364, %v425
    %v446 = vadd.f32 %v365, %v426
    %447 = vrot.lane.b32.xlu0 %v427, 4
    %v448 = vpop.permute.xlu0 %447
    %449 = vrot.lane.b32.xlu0 %v428, 4
    %v450 = vpop.permute.xlu0 %449
    %451 = vrot.lane.b32.xlu0 %v429, 4
    %v452 = vpop.permute.xlu0 %451
    %453 = vrot.lane.b32.xlu0 %v430, 4
    %v454 = vpop.permute.xlu0 %453
    %455 = vrot.lane.b32.xlu0 %v431, 4
    %v456 = vpop.permute.xlu0 %455
    %457 = vrot.lane.b32.xlu0 %v432, 4
    %v458 = vpop.permute.xlu0 %457
    %459 = vrot.lane.b32.xlu0 %v433, 4
    %v460 = vpop.permute.xlu0 %459
    %461 = vrot.lane.b32.xlu0 %v434, 4
    %v462 = vpop.permute.xlu0 %461
    %463 = vrot.lane.b32.xlu0 %v435, 4
    %v464 = vpop.permute.xlu0 %463
    %465 = vrot.lane.b32.xlu0 %v436, 4
    %v466 = vpop.permute.xlu0 %465
    %467 = vrot.lane.b32.xlu0 %v437, 4
    %v468 = vpop.permute.xlu0 %467
    %469 = vrot.lane.b32.xlu0 %v438, 4
    %v470 = vpop.permute.xlu0 %469
    %471 = vrot.lane.b32.xlu0 %v439, 4
    %v472 = vpop.permute.xlu0 %471
    %473 = vrot.lane.b32.xlu0 %v440, 4
    %v474 = vpop.permute.xlu0 %473
    %475 = vrot.lane.b32.xlu0 %v441, 4
    %v476 = vpop.permute.xlu0 %475
    %477 = vrot.lane.b32.xlu0 %v442, 4
    %v478 = vpop.permute.xlu0 %477
    %479 = vrot.lane.b32.xlu0 %v443, 4
    %v480 = vpop.permute.xlu0 %479
    %481 = vrot.lane.b32.xlu0 %v444, 4
    %v482 = vpop.permute.xlu0 %481
    %483 = vrot.lane.b32.xlu0 %v445, 4
    %v484 = vpop.permute.xlu0 %483
    %485 = vrot.lane.b32.xlu0 %v446, 4
    %v486 = vpop.permute.xlu0 %485
    %vm487 = vcmp.ge.s32.totalorder %v63, 4
    %v488 = vsel %vm487, %v448, 0.0
    %v489 = vsel %vm487, %v450, 0.0
    %v490 = vsel %vm487, %v452, 0.0
    %v491 = vsel %vm487, %v454, 0.0
    %v492 = vsel %vm487, %v456, 0.0
    %v493 = vsel %vm487, %v458, 0.0
    %v494 = vsel %vm487, %v460, 0.0
    %v495 = vsel %vm487, %v462, 0.0
    %v496 = vsel %vm487, %v464, 0.0
    %v497 = vsel %vm487, %v466, 0.0
    %v498 = vsel %vm487, %v468, 0.0
    %v499 = vsel %vm487, %v470, 0.0
    %v500 = vsel %vm487, %v472, 0.0
    %v501 = vsel %vm487, %v474, 0.0
    %v502 = vsel %vm487, %v476, 0.0
    %v503 = vsel %vm487, %v478, 0.0
    %v504 = vsel %vm487, %v480, 0.0
    %v505 = vsel %vm487, %v482, 0.0
    %v506 = vsel %vm487, %v484, 0.0
    %v507 = vsel %vm487, %v486, 0.0
    %v508 = vadd.f32 %v427, %v488
    %v509 = vadd.f32 %v428, %v489
    %v510 = vadd.f32 %v429, %v490
    %v511 = vadd.f32 %v430, %v491
    %v512 = vadd.f32 %v431, %v492
    %v513 = vadd.f32 %v432, %v493
    %v514 = vadd.f32 %v433, %v494
    %v515 = vadd.f32 %v434, %v495
    %v516 = vadd.f32 %v435, %v496
    %v517 = vadd.f32 %v436, %v497
    %v518 = vadd.f32 %v437, %v498
    %v519 = vadd.f32 %v438, %v499
    %v520 = vadd.f32 %v439, %v500
    %v521 = vadd.f32 %v440, %v501
    %v522 = vadd.f32 %v441, %v502
    %v523 = vadd.f32 %v442, %v503
    %v524 = vadd.f32 %v443, %v504
    %v525 = vadd.f32 %v444, %v505
    %v526 = vadd.f32 %v445, %v506
    %v527 = vadd.f32 %v446, %v507
    %528 = vrot.lane.b32.xlu0 %v508, 8
    %v529 = vpop.permute.xlu0 %528
    %530 = vrot.lane.b32.xlu0 %v509, 8
    %v531 = vpop.permute.xlu0 %530
    %532 = vrot.lane.b32.xlu0 %v510, 8
    %v533 = vpop.permute.xlu0 %532
    %534 = vrot.lane.b32.xlu0 %v511, 8
    %v535 = vpop.permute.xlu0 %534
    %536 = vrot.lane.b32.xlu0 %v512, 8
    %v537 = vpop.permute.xlu0 %536
    %538 = vrot.lane.b32.xlu0 %v513, 8
    %v539 = vpop.permute.xlu0 %538
    %540 = vrot.lane.b32.xlu0 %v514, 8
    %v541 = vpop.permute.xlu0 %540
    %542 = vrot.lane.b32.xlu0 %v515, 8
    %v543 = vpop.permute.xlu0 %542
    %544 = vrot.lane.b32.xlu0 %v516, 8
    %v545 = vpop.permute.xlu0 %544
    %546 = vrot.lane.b32.xlu0 %v517, 8
    %v547 = vpop.permute.xlu0 %546
    %548 = vrot.lane.b32.xlu0 %v518, 8
    %v549 = vpop.permute.xlu0 %548
    %550 = vrot.lane.b32.xlu0 %v519, 8
    %v551 = vpop.permute.xlu0 %550
    %552 = vrot.lane.b32.xlu0 %v520, 8
    %v553 = vpop.permute.xlu0 %552
    %554 = vrot.lane.b32.xlu0 %v521, 8
    %v555 = vpop.permute.xlu0 %554
    %556 = vrot.lane.b32.xlu0 %v522, 8
    %v557 = vpop.permute.xlu0 %556
    %558 = vrot.lane.b32.xlu0 %v523, 8
    %v559 = vpop.permute.xlu0 %558
    %560 = vrot.lane.b32.xlu0 %v524, 8
    %v561 = vpop.permute.xlu0 %560
    %562 = vrot.lane.b32.xlu0 %v525, 8
    %v563 = vpop.permute.xlu0 %562
    %564 = vrot.lane.b32.xlu0 %v526, 8
    %v565 = vpop.permute.xlu0 %564
    %566 = vrot.lane.b32.xlu0 %v527, 8
    %v567 = vpop.permute.xlu0 %566
    %vm568 = vcmp.ge.s32.totalorder %v63, 8
    %v569 = vsel %vm568, %v529, 0.0
    %v570 = vsel %vm568, %v531, 0.0
    %v571 = vsel %vm568, %v533, 0.0
    %v572 = vsel %vm568, %v535, 0.0
    %v573 = vsel %vm568, %v537, 0.0
    %v574 = vsel %vm568, %v539, 0.0
    %v575 = vsel %vm568, %v541, 0.0
    %v576 = vsel %vm568, %v543, 0.0
    %v577 = vsel %vm568, %v545, 0.0
    %v578 = vsel %vm568, %v547, 0.0
    %v579 = vsel %vm568, %v549, 0.0
    %v580 = vsel %vm568, %v551, 0.0
    %v581 = vsel %vm568, %v553, 0.0
    %v582 = vsel %vm568, %v555, 0.0
    %v583 = vsel %vm568, %v557, 0.0
    %v584 = vsel %vm568, %v559, 0.0
    %v585 = vsel %vm568, %v561, 0.0
    %v586 = vsel %vm568, %v563, 0.0
    %v587 = vsel %vm568, %v565, 0.0
    %v588 = vsel %vm568, %v567, 0.0
    %v589 = vadd.f32 %v508, %v569
    %v590 = vadd.f32 %v509, %v570
    %v591 = vadd.f32 %v510, %v571
    %v592 = vadd.f32 %v511, %v572
    %v593 = vadd.f32 %v512, %v573
    %v594 = vadd.f32 %v513, %v574
    %v595 = vadd.f32 %v514, %v575
    %v596 = vadd.f32 %v515, %v576
    %v597 = vadd.f32 %v516, %v577
    %v598 = vadd.f32 %v517, %v578
    %v599 = vadd.f32 %v518, %v579
    %v600 = vadd.f32 %v519, %v580
    %v601 = vadd.f32 %v520, %v581
    %v602 = vadd.f32 %v521, %v582
    %v603 = vadd.f32 %v522, %v583
    %v604 = vadd.f32 %v523, %v584
    %v605 = vadd.f32 %v524, %v585
    %v606 = vadd.f32 %v525, %v586
    %v607 = vadd.f32 %v526, %v587
    %v608 = vadd.f32 %v527, %v588
    %609 = vrot.lane.b32.xlu0 %v589, 16
    %v610 = vpop.permute.xlu0 %609
    %611 = vrot.lane.b32.xlu0 %v590, 16
    %v612 = vpop.permute.xlu0 %611
    %613 = vrot.lane.b32.xlu0 %v591, 16
    %v614 = vpop.permute.xlu0 %613
    %615 = vrot.lane.b32.xlu0 %v592, 16
    %v616 = vpop.permute.xlu0 %615
    %617 = vrot.lane.b32.xlu0 %v593, 16
    %v618 = vpop.permute.xlu0 %617
    %619 = vrot.lane.b32.xlu0 %v594, 16
    %v620 = vpop.permute.xlu0 %619
    %621 = vrot.lane.b32.xlu0 %v595, 16
    %v622 = vpop.permute.xlu0 %621
    %623 = vrot.lane.b32.xlu0 %v596, 16
    %v624 = vpop.permute.xlu0 %623
    %625 = vrot.lane.b32.xlu0 %v597, 16
    %v626 = vpop.permute.xlu0 %625
    %627 = vrot.lane.b32.xlu0 %v598, 16
    %v628 = vpop.permute.xlu0 %627
    %629 = vrot.lane.b32.xlu0 %v599, 16
    %v630 = vpop.permute.xlu0 %629
    %631 = vrot.lane.b32.xlu0 %v600, 16
    %v632 = vpop.permute.xlu0 %631
    %633 = vrot.lane.b32.xlu0 %v601, 16
    %v634 = vpop.permute.xlu0 %633
    %635 = vrot.lane.b32.xlu0 %v602, 16
    %v636 = vpop.permute.xlu0 %635
    %637 = vrot.lane.b32.xlu0 %v603, 16
    %v638 = vpop.permute.xlu0 %637
    %639 = vrot.lane.b32.xlu0 %v604, 16
    %v640 = vpop.permute.xlu0 %639
    %641 = vrot.lane.b32.xlu0 %v605, 16
    %v642 = vpop.permute.xlu0 %641
    %643 = vrot.lane.b32.xlu0 %v606, 16
    %v644 = vpop.permute.xlu0 %643
    %645 = vrot.lane.b32.xlu0 %v607, 16
    %v646 = vpop.permute.xlu0 %645
    %647 = vrot.lane.b32.xlu0 %v608, 16
    %v648 = vpop.permute.xlu0 %647
    %vm649 = vcmp.ge.s32.totalorder %v63, 16
    %v650 = vsel %vm649, %v610, 0.0
    %v651 = vsel %vm649, %v612, 0.0
    %v652 = vsel %vm649, %v614, 0.0
    %v653 = vsel %vm649, %v616, 0.0
    %v654 = vsel %vm649, %v618, 0.0
    %v655 = vsel %vm649, %v620, 0.0
    %v656 = vsel %vm649, %v622, 0.0
    %v657 = vsel %vm649, %v624, 0.0
    %v658 = vsel %vm649, %v626, 0.0
    %v659 = vsel %vm649, %v628, 0.0
    %v660 = vsel %vm649, %v630, 0.0
    %v661 = vsel %vm649, %v632, 0.0
    %v662 = vsel %vm649, %v634, 0.0
    %v663 = vsel %vm649, %v636, 0.0
    %v664 = vsel %vm649, %v638, 0.0
    %v665 = vsel %vm649, %v640, 0.0
    %v666 = vsel %vm649, %v642, 0.0
    %v667 = vsel %vm649, %v644, 0.0
    %v668 = vsel %vm649, %v646, 0.0
    %v669 = vsel %vm649, %v648, 0.0
    %v670 = vadd.f32 %v589, %v650
    %v671 = vadd.f32 %v590, %v651
    %v672 = vadd.f32 %v591, %v652
    %v673 = vadd.f32 %v592, %v653
    %v674 = vadd.f32 %v593, %v654
    %v675 = vadd.f32 %v594, %v655
    %v676 = vadd.f32 %v595, %v656
    %v677 = vadd.f32 %v596, %v657
    %v678 = vadd.f32 %v597, %v658
    %v679 = vadd.f32 %v598, %v659
    %v680 = vadd.f32 %v599, %v660
    %v681 = vadd.f32 %v600, %v661
    %v682 = vadd.f32 %v601, %v662
    %v683 = vadd.f32 %v602, %v663
    %v684 = vadd.f32 %v603, %v664
    %v685 = vadd.f32 %v604, %v665
    %v686 = vadd.f32 %v605, %v666
    %v687 = vadd.f32 %v606, %v667
    %v688 = vadd.f32 %v607, %v668
    %v689 = vadd.f32 %v608, %v669
    %690 = vrot.lane.b32.xlu0 %v670, 32
    %v691 = vpop.permute.xlu0 %690
    %692 = vrot.lane.b32.xlu0 %v671, 32
    %v693 = vpop.permute.xlu0 %692
    %694 = vrot.lane.b32.xlu0 %v672, 32
    %v695 = vpop.permute.xlu0 %694
    %696 = vrot.lane.b32.xlu0 %v673, 32
    %v697 = vpop.permute.xlu0 %696
    %698 = vrot.lane.b32.xlu0 %v674, 32
    %v699 = vpop.permute.xlu0 %698
    %700 = vrot.lane.b32.xlu0 %v675, 32
    %v701 = vpop.permute.xlu0 %700
    %702 = vrot.lane.b32.xlu0 %v676, 32
    %v703 = vpop.permute.xlu0 %702
    %704 = vrot.lane.b32.xlu0 %v677, 32
    %v705 = vpop.permute.xlu0 %704
    %706 = vrot.lane.b32.xlu0 %v678, 32
    %v707 = vpop.permute.xlu0 %706
    %708 = vrot.lane.b32.xlu0 %v679, 32
    %v709 = vpop.permute.xlu0 %708
    %710 = vrot.lane.b32.xlu0 %v680, 32
    %v711 = vpop.permute.xlu0 %710
    %712 = vrot.lane.b32.xlu0 %v681, 32
    %v713 = vpop.permute.xlu0 %712
    %714 = vrot.lane.b32.xlu0 %v682, 32
    %v715 = vpop.permute.xlu0 %714
    %716 = vrot.lane.b32.xlu0 %v683, 32
    %v717 = vpop.permute.xlu0 %716
    %718 = vrot.lane.b32.xlu0 %v684, 32
    %v719 = vpop.permute.xlu0 %718
    %720 = vrot.lane.b32.xlu0 %v685, 32
    %v721 = vpop.permute.xlu0 %720
    %722 = vrot.lane.b32.xlu0 %v686, 32
    %v723 = vpop.permute.xlu0 %722
    %724 = vrot.lane.b32.xlu0 %v687, 32
    %v725 = vpop.permute.xlu0 %724
    %726 = vrot.lane.b32.xlu0 %v688, 32
    %v727 = vpop.permute.xlu0 %726
    %728 = vrot.lane.b32.xlu0 %v689, 32
    %v729 = vpop.permute.xlu0 %728
    %vm730 = vcmp.ge.s32.totalorder %v63, 32
    %v731 = vsel %vm730, %v691, 0.0
    %v732 = vsel %vm730, %v693, 0.0
    %v733 = vsel %vm730, %v695, 0.0
    %v734 = vsel %vm730, %v697, 0.0
    %v735 = vsel %vm730, %v699, 0.0
    %v736 = vsel %vm730, %v701, 0.0
    %v737 = vsel %vm730, %v703, 0.0
    %v738 = vsel %vm730, %v705, 0.0
    %v739 = vsel %vm730, %v707, 0.0
    %v740 = vsel %vm730, %v709, 0.0
    %v741 = vsel %vm730, %v711, 0.0
    %v742 = vsel %vm730, %v713, 0.0
    %v743 = vsel %vm730, %v715, 0.0
    %v744 = vsel %vm730, %v717, 0.0
    %v745 = vsel %vm730, %v719, 0.0
    %v746 = vsel %vm730, %v721, 0.0
    %v747 = vsel %vm730, %v723, 0.0
    %v748 = vsel %vm730, %v725, 0.0
    %v749 = vsel %vm730, %v727, 0.0
    %v750 = vsel %vm730, %v729, 0.0
    %v751 = vadd.f32 %v670, %v731
    %v752 = vadd.f32 %v671, %v732
    %v753 = vadd.f32 %v672, %v733
    %v754 = vadd.f32 %v673, %v734
    %v755 = vadd.f32 %v674, %v735
    %v756 = vadd.f32 %v675, %v736
    %v757 = vadd.f32 %v676, %v737
    %v758 = vadd.f32 %v677, %v738
    %v759 = vadd.f32 %v678, %v739
    %v760 = vadd.f32 %v679, %v740
    %v761 = vadd.f32 %v680, %v741
    %v762 = vadd.f32 %v681, %v742
    %v763 = vadd.f32 %v682, %v743
    %v764 = vadd.f32 %v683, %v744
    %v765 = vadd.f32 %v684, %v745
    %v766 = vadd.f32 %v685, %v746
    %v767 = vadd.f32 %v686, %v747
    %v768 = vadd.f32 %v687, %v748
    %v769 = vadd.f32 %v688, %v749
    %v770 = vadd.f32 %v689, %v750
    %771 = vrot.lane.b32.xlu0 %v751, 64
    %v772 = vpop.permute.xlu0 %771
    %773 = vrot.lane.b32.xlu0 %v752, 64
    %v774 = vpop.permute.xlu0 %773
    %775 = vrot.lane.b32.xlu0 %v753, 64
    %v776 = vpop.permute.xlu0 %775
    %777 = vrot.lane.b32.xlu0 %v754, 64
    %v778 = vpop.permute.xlu0 %777
    %779 = vrot.lane.b32.xlu0 %v755, 64
    %v780 = vpop.permute.xlu0 %779
    %781 = vrot.lane.b32.xlu0 %v756, 64
    %v782 = vpop.permute.xlu0 %781
    %783 = vrot.lane.b32.xlu0 %v757, 64
    %v784 = vpop.permute.xlu0 %783
    %785 = vrot.lane.b32.xlu0 %v758, 64
    %v786 = vpop.permute.xlu0 %785
    %787 = vrot.lane.b32.xlu0 %v759, 64
    %v788 = vpop.permute.xlu0 %787
    %789 = vrot.lane.b32.xlu0 %v760, 64
    %v790 = vpop.permute.xlu0 %789
    %791 = vrot.lane.b32.xlu0 %v761, 64
    %v792 = vpop.permute.xlu0 %791
    %793 = vrot.lane.b32.xlu0 %v762, 64
    %v794 = vpop.permute.xlu0 %793
    %795 = vrot.lane.b32.xlu0 %v763, 64
    %v796 = vpop.permute.xlu0 %795
    %797 = vrot.lane.b32.xlu0 %v764, 64
    %v798 = vpop.permute.xlu0 %797
    %799 = vrot.lane.b32.xlu0 %v765, 64
    %v800 = vpop.permute.xlu0 %799
    %801 = vrot.lane.b32.xlu0 %v766, 64
    %v802 = vpop.permute.xlu0 %801
    %803 = vrot.lane.b32.xlu0 %v767, 64
    %v804 = vpop.permute.xlu0 %803
    %805 = vrot.lane.b32.xlu0 %v768, 64
    %v806 = vpop.permute.xlu0 %805
    %807 = vrot.lane.b32.xlu0 %v769, 64
    %v808 = vpop.permute.xlu0 %807
    %809 = vrot.lane.b32.xlu0 %v770, 64
    %v810 = vpop.permute.xlu0 %809
    %vm811 = vcmp.ge.s32.totalorder %v63, 64
    %v812 = vsel %vm811, %v772, 0.0
    %v813 = vsel %vm811, %v774, 0.0
    %v814 = vsel %vm811, %v776, 0.0
    %v815 = vsel %vm811, %v778, 0.0
    %v816 = vsel %vm811, %v780, 0.0
    %v817 = vsel %vm811, %v782, 0.0
    %v818 = vsel %vm811, %v784, 0.0
    %v819 = vsel %vm811, %v786, 0.0
    %v820 = vsel %vm811, %v788, 0.0
    %v821 = vsel %vm811, %v790, 0.0
    %v822 = vsel %vm811, %v792, 0.0
    %v823 = vsel %vm811, %v794, 0.0
    %v824 = vsel %vm811, %v796, 0.0
    %v825 = vsel %vm811, %v798, 0.0
    %v826 = vsel %vm811, %v800, 0.0
    %v827 = vsel %vm811, %v802, 0.0
    %v828 = vsel %vm811, %v804, 0.0
    %v829 = vsel %vm811, %v806, 0.0
    %v830 = vsel %vm811, %v808, 0.0
    %v831 = vsel %vm811, %v810, 0.0
    %v832 = vadd.f32 %v751, %v812
    %v833 = vadd.f32 %v752, %v813
    %v834 = vadd.f32 %v753, %v814
    %v835 = vadd.f32 %v754, %v815
    %v836 = vadd.f32 %v755, %v816
    %v837 = vadd.f32 %v756, %v817
    %v838 = vadd.f32 %v757, %v818
    %v839 = vadd.f32 %v758, %v819
    %v840 = vadd.f32 %v759, %v820
    %v841 = vadd.f32 %v760, %v821
    %v842 = vadd.f32 %v761, %v822
    %v843 = vadd.f32 %v762, %v823
    %v844 = vadd.f32 %v763, %v824
    %v845 = vadd.f32 %v764, %v825
    %v846 = vadd.f32 %v765, %v826
    %v847 = vadd.f32 %v766, %v827
    %v848 = vadd.f32 %v767, %v828
    %v849 = vadd.f32 %v768, %v829
    %v850 = vadd.f32 %v769, %v830
    %v851 = vadd.f32 %v770, %v831
    %v852 = vsub.f32 0.0, %v832
    %v853 = vsub.f32 0.0, %v833
    %v854 = vsub.f32 0.0, %v834
    %v855 = vsub.f32 0.0, %v835
    %v856 = vsub.f32 0.0, %v836
    %v857 = vsub.f32 0.0, %v837
    %v858 = vsub.f32 0.0, %v838
    %v859 = vsub.f32 0.0, %v839
    %v860 = vsub.f32 0.0, %v840
    %v861 = vsub.f32 0.0, %v841
    %v862 = vsub.f32 0.0, %v842
    %v863 = vsub.f32 0.0, %v843
    %v864 = vsub.f32 0.0, %v844
    %v865 = vsub.f32 0.0, %v845
    %v866 = vsub.f32 0.0, %v846
    %v867 = vsub.f32 0.0, %v847
    %v868 = vsub.f32 0.0, %v848
    %v869 = vsub.f32 0.0, %v849
    %v870 = vsub.f32 0.0, %v850
    %v871 = vsub.f32 0.0, %v851
    %v872 = vmul.f32 %v852, 1.442695
    %v873 = vpow.pop %v872
    %v874 = vmul.f32 %v853, 1.442695
    %v875 = vpow.pop %v874
    %v876 = vmul.f32 %v854, 1.442695
    %v877 = vpow.pop %v876
    %v878 = vmul.f32 %v855, 1.442695
    %v879 = vpow.pop %v878
    %v880 = vmul.f32 %v856, 1.442695
    %v881 = vpow.pop %v880
    %v882 = vmul.f32 %v857, 1.442695
    %v883 = vpow.pop %v882
    %v884 = vmul.f32 %v858, 1.442695
    %v885 = vpow.pop %v884
    %v886 = vmul.f32 %v859, 1.442695
    %v887 = vpow.pop %v886
    %v888 = vmul.f32 %v860, 1.442695
    %v889 = vpow.pop %v888
    %v890 = vmul.f32 %v861, 1.442695
    %v891 = vpow.pop %v890
    %v892 = vmul.f32 %v862, 1.442695
    %v893 = vpow.pop %v892
    %v894 = vmul.f32 %v863, 1.442695
    %v895 = vpow.pop %v894
    %v896 = vmul.f32 %v864, 1.442695
    %v897 = vpow.pop %v896
    %v898 = vmul.f32 %v865, 1.442695
    %v899 = vpow.pop %v898
    %v900 = vmul.f32 %v866, 1.442695
    %v901 = vpow.pop %v900
    %v902 = vmul.f32 %v867, 1.442695
    %v903 = vpow.pop %v902
    %v904 = vmul.f32 %v868, 1.442695
    %v905 = vpow.pop %v904
    %v906 = vmul.f32 %v869, 1.442695
    %v907 = vpow.pop %v906
    %v908 = vmul.f32 %v870, 1.442695
    %v909 = vpow.pop %v908
    %v910 = vmul.f32 %v871, 1.442695
    %v911 = vpow.pop %v910
    %912 = vrot.lane.b32.xlu0 %v873, 1
    %v913 = vpop.permute.xlu0 %912
    %914 = vrot.lane.b32.xlu0 %v875, 1
    %v915 = vpop.permute.xlu0 %914
    %916 = vrot.lane.b32.xlu0 %v877, 1
    %v917 = vpop.permute.xlu0 %916
    %918 = vrot.lane.b32.xlu0 %v879, 1
    %v919 = vpop.permute.xlu0 %918
    %920 = vrot.lane.b32.xlu0 %v881, 1
    %v921 = vpop.permute.xlu0 %920
    %922 = vrot.lane.b32.xlu0 %v883, 1
    %v923 = vpop.permute.xlu0 %922
    %924 = vrot.lane.b32.xlu0 %v885, 1
    %v925 = vpop.permute.xlu0 %924
    %926 = vrot.lane.b32.xlu0 %v887, 1
    %v927 = vpop.permute.xlu0 %926
    %928 = vrot.lane.b32.xlu0 %v889, 1
    %v929 = vpop.permute.xlu0 %928
    %930 = vrot.lane.b32.xlu0 %v891, 1
    %v931 = vpop.permute.xlu0 %930
    %932 = vrot.lane.b32.xlu0 %v893, 1
    %v933 = vpop.permute.xlu0 %932
    %934 = vrot.lane.b32.xlu0 %v895, 1
    %v935 = vpop.permute.xlu0 %934
    %936 = vrot.lane.b32.xlu0 %v897, 1
    %v937 = vpop.permute.xlu0 %936
    %938 = vrot.lane.b32.xlu0 %v899, 1
    %v939 = vpop.permute.xlu0 %938
    %940 = vrot.lane.b32.xlu0 %v901, 1
    %v941 = vpop.permute.xlu0 %940
    %942 = vrot.lane.b32.xlu0 %v903, 1
    %v943 = vpop.permute.xlu0 %942
    %944 = vrot.lane.b32.xlu0 %v905, 1
    %v945 = vpop.permute.xlu0 %944
    %946 = vrot.lane.b32.xlu0 %v907, 1
    %v947 = vpop.permute.xlu0 %946
    %948 = vrot.lane.b32.xlu0 %v909, 1
    %v949 = vpop.permute.xlu0 %948
    %950 = vrot.lane.b32.xlu0 %v911, 1
    %v951 = vpop.permute.xlu0 %950
    %vm952 = vcmp.eq.s32.totalorder %v63, 0
    %v953 = vsel %vm952, 1.0, %v913
    %v954 = vsel %vm952, 1.0, %v915
    %v955 = vsel %vm952, 1.0, %v917
    %v956 = vsel %vm952, 1.0, %v919
    %v957 = vsel %vm952, 1.0, %v921
    %v958 = vsel %vm952, 1.0, %v923
    %v959 = vsel %vm952, 1.0, %v925
    %v960 = vsel %vm952, 1.0, %v927
    %v961 = vsel %vm952, 1.0, %v929
    %v962 = vsel %vm952, 1.0, %v931
    %v963 = vsel %vm952, 1.0, %v933
    %v964 = vsel %vm952, 1.0, %v935
    %v965 = vsel %vm952, 1.0, %v937
    %v966 = vsel %vm952, 1.0, %v939
    %v967 = vsel %vm952, 1.0, %v941
    %v968 = vsel %vm952, 1.0, %v943
    %v969 = vsel %vm952, 1.0, %v945
    %v970 = vsel %vm952, 1.0, %v947
    %v971 = vsel %vm952, 1.0, %v949
    %v972 = vsel %vm952, 1.0, %v951
    %v973 = vsub.f32 %v953, %v873
    %v974 = vsub.f32 %v954, %v875
    %v975 = vsub.f32 %v955, %v877
    %v976 = vsub.f32 %v956, %v879
    %v977 = vsub.f32 %v957, %v881
    %v978 = vsub.f32 %v958, %v883
    %v979 = vsub.f32 %v959, %v885
    %v980 = vsub.f32 %v960, %v887
    %v981 = vsub.f32 %v961, %v889
    %v982 = vsub.f32 %v962, %v891
    %v983 = vsub.f32 %v963, %v893
    %v984 = vsub.f32 %v964, %v895
    %v985 = vsub.f32 %v965, %v897
    %v986 = vsub.f32 %v966, %v899
    %v987 = vsub.f32 %v967, %v901
    %v988 = vsub.f32 %v968, %v903
    %v989 = vsub.f32 %v969, %v905
    %v990 = vsub.f32 %v970, %v907
    %v991 = vsub.f32 %v971, %v909
    %v992 = vsub.f32 %v972, %v911
    %v993 = vld [vmem:[#allocation7] sm:$0xff]
    %v994 = vld [vmem:[#allocation7 + $0x18] sm:$0xff]
    %v995 = vld [vmem:[#allocation7 + $0x30] sm:$0xff]
    %v996 = vld [vmem:[#allocation7 + $0x48] sm:$0xff]
    %v997 = vld [vmem:[#allocation7 + $0x60] sm:$0xff]
    %v998 = vld [vmem:[#allocation7 + $0x78] sm:$0xff]
    %v999 = vld [vmem:[#allocation7 + $0x90] sm:$0xff]
    %v1000 = vld [vmem:[#allocation7 + $0xa8] sm:$0xff]
    %v1001 = vld [vmem:[#allocation7 + $0xc0] sm:$0xff]
    %v1002 = vld [vmem:[#allocation7 + $0xd8] sm:$0xff]
    %v1003 = vld [vmem:[#allocation7 + $0xf0] sm:$0xff]
    %v1004 = vld [vmem:[#allocation7 + $0x108] sm:$0xff]
    %v1005 = vld [vmem:[#allocation7 + $0x120] sm:$0xff]
    %v1006 = vld [vmem:[#allocation7 + $0x138] sm:$0xff]
    %v1007 = vld [vmem:[#allocation7 + $0x150] sm:$0xff]
    %v1008 = vld [vmem:[#allocation7 + $0x168] sm:$0xff]
    %v1009 = vld [vmem:[#allocation7 + $0x180] sm:$0xff]
    %v1010 = vld [vmem:[#allocation7 + $0x198] sm:$0xff]
    %v1011 = vld [vmem:[#allocation7 + $0x1b0] sm:$0xff]
    %v1012 = vld [vmem:[#allocation7 + $0x1c8] sm:$0xff]
    %v1013 = vmul.f32 %v993, %v973
    %v1014 = vmul.f32 %v994, %v974
    %v1015 = vmul.f32 %v995, %v975
    %v1016 = vmul.f32 %v996, %v976
    %v1017 = vmul.f32 %v997, %v977
    %v1018 = vmul.f32 %v998, %v978
    %v1019 = vmul.f32 %v999, %v979
    %v1020 = vmul.f32 %v1000, %v980
    %v1021 = vmul.f32 %v1001, %v981
    %v1022 = vmul.f32 %v1002, %v982
    %v1023 = vmul.f32 %v1003, %v983
    %v1024 = vmul.f32 %v1004, %v984
    %v1025 = vmul.f32 %v1005, %v985
    %v1026 = vmul.f32 %v1006, %v986
    %v1027 = vmul.f32 %v1007, %v987
    %v1028 = vmul.f32 %v1008, %v988
    %v1029 = vmul.f32 %v1009, %v989
    %v1030 = vmul.f32 %v1010, %v990
    %v1031 = vmul.f32 %v1011, %v991
    %v1032 = vmul.f32 %v1012, %v992
    %1033 = vadd.xlane.f32.xlu0 %v1013
    %v1034 = vpop.xlane.xlu0 %1033
    %1035 = vadd.xlane.f32.xlu0 %v1014
    %v1036 = vpop.xlane.xlu0 %1035
    %1037 = vadd.xlane.f32.xlu0 %v1015
    %v1038 = vpop.xlane.xlu0 %1037
    %1039 = vadd.xlane.f32.xlu0 %v1016
    %v1040 = vpop.xlane.xlu0 %1039
    %1041 = vadd.xlane.f32.xlu0 %v1017
    %v1042 = vpop.xlane.xlu0 %1041
    %1043 = vadd.xlane.f32.xlu0 %v1018
    %v1044 = vpop.xlane.xlu0 %1043
    %1045 = vadd.xlane.f32.xlu0 %v1019
    %v1046 = vpop.xlane.xlu0 %1045
    %1047 = vadd.xlane.f32.xlu0 %v1020
    %v1048 = vpop.xlane.xlu0 %1047
    %1049 = vadd.xlane.f32.xlu0 %v1021
    %v1050 = vpop.xlane.xlu0 %1049
    %1051 = vadd.xlane.f32.xlu0 %v1022
    %v1052 = vpop.xlane.xlu0 %1051
    %1053 = vadd.xlane.f32.xlu0 %v1023
    %v1054 = vpop.xlane.xlu0 %1053
    %1055 = vadd.xlane.f32.xlu0 %v1024
    %v1056 = vpop.xlane.xlu0 %1055
    %1057 = vadd.xlane.f32.xlu0 %v1025
    %v1058 = vpop.xlane.xlu0 %1057
    %1059 = vadd.xlane.f32.xlu0 %v1026
    %v1060 = vpop.xlane.xlu0 %1059
    %1061 = vadd.xlane.f32.xlu0 %v1027
    %v1062 = vpop.xlane.xlu0 %1061
    %1063 = vadd.xlane.f32.xlu0 %v1028
    %v1064 = vpop.xlane.xlu0 %1063
    %1065 = vadd.xlane.f32.xlu0 %v1029
    %v1066 = vpop.xlane.xlu0 %1065
    %1067 = vadd.xlane.f32.xlu0 %v1030
    %v1068 = vpop.xlane.xlu0 %1067
    %1069 = vadd.xlane.f32.xlu0 %v1031
    %v1070 = vpop.xlane.xlu0 %1069
    %1071 = vadd.xlane.f32.xlu0 %v1032
    %v1072 = vpop.xlane.xlu0 %1071
    %v1093 = vperm.slane %v1034, 0
    %v1094 = vperm.slane %v1034, 1
    %v1095 = vperm.slane %v1034, 2
    %v1096 = vperm.slane %v1034, 3
    %v1097 = vperm.slane %v1034, 4
    %v1098 = vperm.slane %v1034, 5
    %v1099 = vperm.slane %v1034, 6
    %v1100 = vperm.slane %v1034, 7
    %v1101 = vperm.slane %v1036, 0
    %v1102 = vperm.slane %v1036, 1
    %v1103 = vperm.slane %v1036, 2
    %v1104 = vperm.slane %v1036, 3
    %v1105 = vperm.slane %v1036, 4
    %v1106 = vperm.slane %v1036, 5
    %v1107 = vperm.slane %v1036, 6
    %v1108 = vperm.slane %v1036, 7
    %v1109 = vperm.slane %v1038, 0
    %v1110 = vperm.slane %v1038, 1
    %v1111 = vperm.slane %v1038, 2
    %v1112 = vperm.slane %v1038, 3
    %v1113 = vperm.slane %v1038, 4
    %v1114 = vperm.slane %v1038, 5
    %v1115 = vperm.slane %v1038, 6
    %v1116 = vperm.slane %v1038, 7
    %v1117 = vperm.slane %v1040, 0
    %v1118 = vperm.slane %v1040, 1
    %v1119 = vperm.slane %v1040, 2
    %v1120 = vperm.slane %v1040, 3
    %v1121 = vperm.slane %v1040, 4
    %v1122 = vperm.slane %v1040, 5
    %v1123 = vperm.slane %v1040, 6
    %v1124 = vperm.slane %v1040, 7
    %v1125 = vperm.slane %v1042, 0
    %v1126 = vperm.slane %v1042, 1
    %v1127 = vperm.slane %v1042, 2
    %v1128 = vperm.slane %v1042, 3
    %v1129 = vperm.slane %v1042, 4
    %v1130 = vperm.slane %v1042, 5
    %v1131 = vperm.slane %v1042, 6
    %v1132 = vperm.slane %v1042, 7
    %v1133 = vperm.slane %v1044, 0
    %v1134 = vperm.slane %v1044, 1
    %v1135 = vperm.slane %v1044, 2
    %v1136 = vperm.slane %v1044, 3
    %v1137 = vperm.slane %v1044, 4
    %v1138 = vperm.slane %v1044, 5
    %v1139 = vperm.slane %v1044, 6
    %v1140 = vperm.slane %v1044, 7
    %v1141 = vperm.slane %v1046, 0
    %v1142 = vperm.slane %v1046, 1
    %v1143 = vperm.slane %v1046, 2
    %v1144 = vperm.slane %v1046, 3
    %v1145 = vperm.slane %v1046, 4
    %v1146 = vperm.slane %v1046, 5
    %v1147 = vperm.slane %v1046, 6
    %v1148 = vperm.slane %v1046, 7
    %v1149 = vperm.slane %v1048, 0
    %v1150 = vperm.slane %v1048, 1
    %v1151 = vperm.slane %v1048, 2
    %v1152 = vperm.slane %v1048, 3
    %v1153 = vperm.slane %v1048, 4
    %v1154 = vperm.slane %v1048, 5
    %v1155 = vperm.slane %v1048, 6
    %v1156 = vperm.slane %v1048, 7
    %v1157 = vperm.slane %v1050, 0
    %v1158 = vperm.slane %v1050, 1
    %v1159 = vperm.slane %v1050, 2
    %v1160 = vperm.slane %v1050, 3
    %v1161 = vperm.slane %v1050, 4
    %v1162 = vperm.slane %v1050, 5
    %v1163 = vperm.slane %v1050, 6
    %v1164 = vperm.slane %v1050, 7
    %v1165 = vperm.slane %v1052, 0
    %v1166 = vperm.slane %v1052, 1
    %v1167 = vperm.slane %v1052, 2
    %v1168 = vperm.slane %v1052, 3
    %v1169 = vperm.slane %v1052, 4
    %v1170 = vperm.slane %v1052, 5
    %v1171 = vperm.slane %v1052, 6
    %v1172 = vperm.slane %v1052, 7
    %v1173 = vperm.slane %v1054, 0
    %v1174 = vperm.slane %v1054, 1
    %v1175 = vperm.slane %v1054, 2
    %v1176 = vperm.slane %v1054, 3
    %v1177 = vperm.slane %v1054, 4
    %v1178 = vperm.slane %v1054, 5
    %v1179 = vperm.slane %v1054, 6
    %v1180 = vperm.slane %v1054, 7
    %v1181 = vperm.slane %v1056, 0
    %v1182 = vperm.slane %v1056, 1
    %v1183 = vperm.slane %v1056, 2
    %v1184 = vperm.slane %v1056, 3
    %v1185 = vperm.slane %v1056, 4
    %v1186 = vperm.slane %v1056, 5
    %v1187 = vperm.slane %v1056, 6
    %v1188 = vperm.slane %v1056, 7
    %v1189 = vperm.slane %v1058, 0
    %v1190 = vperm.slane %v1058, 1
    %v1191 = vperm.slane %v1058, 2
    %v1192 = vperm.slane %v1058, 3
    %v1193 = vperm.slane %v1058, 4
    %v1194 = vperm.slane %v1058, 5
    %v1195 = vperm.slane %v1058, 6
    %v1196 = vperm.slane %v1058, 7
    %v1197 = vperm.slane %v1060, 0
    %v1198 = vperm.slane %v1060, 1
    %v1199 = vperm.slane %v1060, 2
    %v1200 = vperm.slane %v1060, 3
    %v1201 = vperm.slane %v1060, 4
    %v1202 = vperm.slane %v1060, 5
    %v1203 = vperm.slane %v1060, 6
    %v1204 = vperm.slane %v1060, 7
    %v1205 = vperm.slane %v1062, 0
    %v1206 = vperm.slane %v1062, 1
    %v1207 = vperm.slane %v1062, 2
    %v1208 = vperm.slane %v1062, 3
    %v1209 = vperm.slane %v1062, 4
    %v1210 = vperm.slane %v1062, 5
    %v1211 = vperm.slane %v1062, 6
    %v1212 = vperm.slane %v1062, 7
    %v1213 = vperm.slane %v1064, 0
    %v1214 = vperm.slane %v1064, 1
    %v1215 = vperm.slane %v1064, 2
    %v1216 = vperm.slane %v1064, 3
    %v1217 = vperm.slane %v1064, 4
    %v1218 = vperm.slane %v1064, 5
    %v1219 = vperm.slane %v1064, 6
    %v1220 = vperm.slane %v1064, 7
    %v1221 = vperm.slane %v1066, 0
    %v1222 = vperm.slane %v1066, 1
    %v1223 = vperm.slane %v1066, 2
    %v1224 = vperm.slane %v1066, 3
    %v1225 = vperm.slane %v1066, 4
    %v1226 = vperm.slane %v1066, 5
    %v1227 = vperm.slane %v1066, 6
    %v1228 = vperm.slane %v1066, 7
    %v1229 = vperm.slane %v1068, 0
    %v1230 = vperm.slane %v1068, 1
    %v1231 = vperm.slane %v1068, 2
    %v1232 = vperm.slane %v1068, 3
    %v1233 = vperm.slane %v1068, 4
    %v1234 = vperm.slane %v1068, 5
    %v1235 = vperm.slane %v1068, 6
    %v1236 = vperm.slane %v1068, 7
    %v1237 = vperm.slane %v1070, 0
    %v1238 = vperm.slane %v1070, 1
    %v1239 = vperm.slane %v1070, 2
    %v1240 = vperm.slane %v1070, 3
    %v1241 = vperm.slane %v1070, 4
    %v1242 = vperm.slane %v1070, 5
    %v1243 = vperm.slane %v1070, 6
    %v1244 = vperm.slane %v1070, 7
    %v1245 = vperm.slane %v1072, 0
    %v1246 = vperm.slane %v1072, 1
    %v1247 = vperm.slane %v1072, 2
    %v1248 = vperm.slane %v1072, 3
    %v1249 = vperm.slane %v1072, 4
    %v1250 = vperm.slane %v1072, 5
    %v1251 = vperm.slane %v1072, 6
    %v1252 = vperm.slane %v1072, 7
    %1253 = vst [vmem:[#allocation1] ss:$9 sm:$0xff] %v1093
    %s1254 = scalar_lea.vmem [#allocation1], 1
    %1255 = vst [vmem:[%s1254] ss:$9 sm:$0xff] %v1094
    %s1256 = scalar_lea.vmem [#allocation1], 2
    %1257 = vst [vmem:[%s1256] ss:$9 sm:$0xff] %v1095
    %s1258 = scalar_lea.vmem [#allocation1], 3
    %1259 = vst [vmem:[%s1258] ss:$9 sm:$0xff] %v1096
    %s1260 = scalar_lea.vmem [#allocation1], 4
    %1261 = vst [vmem:[%s1260] ss:$9 sm:$0xff] %v1097
    %s1262 = scalar_lea.vmem [#allocation1], 5
    %1263 = vst [vmem:[%s1262] ss:$9 sm:$0xff] %v1098
    %s1264 = scalar_lea.vmem [#allocation1], 6
    %1265 = vst [vmem:[%s1264] ss:$9 sm:$0xff] %v1099
    %s1266 = scalar_lea.vmem [#allocation1], 7
    %1267 = vst [vmem:[%s1266] ss:$9 sm:$0xff] %v1100
    %v1268 = vld [vmem:[#allocation1] sm:$0xff]
    %1269 = vst [vmem:[#allocation1] ss:$9 sm:$0xff] %v1101
    %1270 = vst [vmem:[%s1254] ss:$9 sm:$0xff] %v1102
    %1271 = vst [vmem:[%s1256] ss:$9 sm:$0xff] %v1103
    %1272 = vst [vmem:[%s1258] ss:$9 sm:$0xff] %v1104
    %1273 = vst [vmem:[%s1260] ss:$9 sm:$0xff] %v1105
    %1274 = vst [vmem:[%s1262] ss:$9 sm:$0xff] %v1106
    %1275 = vst [vmem:[%s1264] ss:$9 sm:$0xff] %v1107
    %1276 = vst [vmem:[%s1266] ss:$9 sm:$0xff] %v1108
    %v1277 = vld [vmem:[#allocation1] sm:$0xff]
    %1278 = vst [vmem:[#allocation1] ss:$9 sm:$0xff] %v1109
    %1279 = vst [vmem:[%s1254] ss:$9 sm:$0xff] %v1110
    %1280 = vst [vmem:[%s1256] ss:$9 sm:$0xff] %v1111
    %1281 = vst [vmem:[%s1258] ss:$9 sm:$0xff] %v1112
    %1282 = vst [vmem:[%s1260] ss:$9 sm:$0xff] %v1113
    %1283 = vst [vmem:[%s1262] ss:$9 sm:$0xff] %v1114
    %1284 = vst [vmem:[%s1264] ss:$9 sm:$0xff] %v1115
    %1285 = vst [vmem:[%s1266] ss:$9 sm:$0xff] %v1116
    %v1286 = vld [vmem:[#allocation1] sm:$0xff]
    %1287 = vst [vmem:[#allocation1] ss:$9 sm:$0xff] %v1117
    %1288 = vst [vmem:[%s1254] ss:$9 sm:$0xff] %v1118
    %1289 = vst [vmem:[%s1256] ss:$9 sm:$0xff] %v1119
    %1290 = vst [vmem:[%s1258] ss:$9 sm:$0xff] %v1120
    %1291 = vst [vmem:[%s1260] ss:$9 sm:$0xff] %v1121
    %1292 = vst [vmem:[%s1262] ss:$9 sm:$0xff] %v1122
    %1293 = vst [vmem:[%s1264] ss:$9 sm:$0xff] %v1123
    %1294 = vst [vmem:[%s1266] ss:$9 sm:$0xff] %v1124
    %v1295 = vld [vmem:[#allocation1] sm:$0xff]
    %1296 = vst [vmem:[#allocation1] ss:$9 sm:$0xff] %v1125
    %1297 = vst [vmem:[%s1254] ss:$9 sm:$0xff] %v1126
    %1298 = vst [vmem:[%s1256] ss:$9 sm:$0xff] %v1127
    %1299 = vst [vmem:[%s1258] ss:$9 sm:$0xff] %v1128
    %1300 = vst [vmem:[%s1260] ss:$9 sm:$0xff] %v1129
    %1301 = vst [vmem:[%s1262] ss:$9 sm:$0xff] %v1130
    %1302 = vst [vmem:[%s1264] ss:$9 sm:$0xff] %v1131
    %1303 = vst [vmem:[%s1266] ss:$9 sm:$0xff] %v1132
    %v1304 = vld [vmem:[#allocation1] sm:$0xff]
    %1305 = vst [vmem:[#allocation1] ss:$9 sm:$0xff] %v1133
    %1306 = vst [vmem:[%s1254] ss:$9 sm:$0xff] %v1134
    %1307 = vst [vmem:[%s1256] ss:$9 sm:$0xff] %v1135
    %1308 = vst [vmem:[%s1258] ss:$9 sm:$0xff] %v1136
    %1309 = vst [vmem:[%s1260] ss:$9 sm:$0xff] %v1137
    %1310 = vst [vmem:[%s1262] ss:$9 sm:$0xff] %v1138
    %1311 = vst [vmem:[%s1264] ss:$9 sm:$0xff] %v1139
    %1312 = vst [vmem:[%s1266] ss:$9 sm:$0xff] %v1140
    %v1313 = vld [vmem:[#allocation1] sm:$0xff]
    %1314 = vst [vmem:[#allocation1] ss:$9 sm:$0xff] %v1141
    %1315 = vst [vmem:[%s1254] ss:$9 sm:$0xff] %v1142
    %1316 = vst [vmem:[%s1256] ss:$9 sm:$0xff] %v1143
    %1317 = vst [vmem:[%s1258] ss:$9 sm:$0xff] %v1144
    %1318 = vst [vmem:[%s1260] ss:$9 sm:$0xff] %v1145
    %1319 = vst [vmem:[%s1262] ss:$9 sm:$0xff] %v1146
    %1320 = vst [vmem:[%s1264] ss:$9 sm:$0xff] %v1147
    %1321 = vst [vmem:[%s1266] ss:$9 sm:$0xff] %v1148
    %v1322 = vld [vmem:[#allocation1] sm:$0xff]
    %1323 = vst [vmem:[#allocation1] ss:$9 sm:$0xff] %v1149
    %1324 = vst [vmem:[%s1254] ss:$9 sm:$0xff] %v1150
    %1325 = vst [vmem:[%s1256] ss:$9 sm:$0xff] %v1151
    %1326 = vst [vmem:[%s1258] ss:$9 sm:$0xff] %v1152
    %1327 = vst [vmem:[%s1260] ss:$9 sm:$0xff] %v1153
    %1328 = vst [vmem:[%s1262] ss:$9 sm:$0xff] %v1154
    %1329 = vst [vmem:[%s1264] ss:$9 sm:$0xff] %v1155
    %1330 = vst [vmem:[%s1266] ss:$9 sm:$0xff] %v1156
    %v1331 = vld [vmem:[#allocation1] sm:$0xff]
    %1332 = vst [vmem:[#allocation1] ss:$9 sm:$0xff] %v1157
    %1333 = vst [vmem:[%s1254] ss:$9 sm:$0xff] %v1158
    %1334 = vst [vmem:[%s1256] ss:$9 sm:$0xff] %v1159
    %1335 = vst [vmem:[%s1258] ss:$9 sm:$0xff] %v1160
    %1336 = vst [vmem:[%s1260] ss:$9 sm:$0xff] %v1161
    %1337 = vst [vmem:[%s1262] ss:$9 sm:$0xff] %v1162
    %1338 = vst [vmem:[%s1264] ss:$9 sm:$0xff] %v1163
    %1339 = vst [vmem:[%s1266] ss:$9 sm:$0xff] %v1164
    %v1340 = vld [vmem:[#allocation1] sm:$0xff]
    %1341 = vst [vmem:[#allocation1] ss:$9 sm:$0xff] %v1165
    %1342 = vst [vmem:[%s1254] ss:$9 sm:$0xff] %v1166
    %1343 = vst [vmem:[%s1256] ss:$9 sm:$0xff] %v1167
    %1344 = vst [vmem:[%s1258] ss:$9 sm:$0xff] %v1168
    %1345 = vst [vmem:[%s1260] ss:$9 sm:$0xff] %v1169
    %1346 = vst [vmem:[%s1262] ss:$9 sm:$0xff] %v1170
    %1347 = vst [vmem:[%s1264] ss:$9 sm:$0xff] %v1171
    %1348 = vst [vmem:[%s1266] ss:$9 sm:$0xff] %v1172
    %v1349 = vld [vmem:[#allocation1] sm:$0xff]
    %1350 = vst [vmem:[#allocation1] ss:$9 sm:$0xff] %v1173
    %1351 = vst [vmem:[%s1254] ss:$9 sm:$0xff] %v1174
    %1352 = vst [vmem:[%s1256] ss:$9 sm:$0xff] %v1175
    %1353 = vst [vmem:[%s1258] ss:$9 sm:$0xff] %v1176
    %1354 = vst [vmem:[%s1260] ss:$9 sm:$0xff] %v1177
    %1355 = vst [vmem:[%s1262] ss:$9 sm:$0xff] %v1178
    %1356 = vst [vmem:[%s1264] ss:$9 sm:$0xff] %v1179
    %1357 = vst [vmem:[%s1266] ss:$9 sm:$0xff] %v1180
    %v1358 = vld [vmem:[#allocation1] sm:$0xff]
    %1359 = vst [vmem:[#allocation1] ss:$9 sm:$0xff] %v1181
    %1360 = vst [vmem:[%s1254] ss:$9 sm:$0xff] %v1182
    %1361 = vst [vmem:[%s1256] ss:$9 sm:$0xff] %v1183
    %1362 = vst [vmem:[%s1258] ss:$9 sm:$0xff] %v1184
    %1363 = vst [vmem:[%s1260] ss:$9 sm:$0xff] %v1185
    %1364 = vst [vmem:[%s1262] ss:$9 sm:$0xff] %v1186
    %1365 = vst [vmem:[%s1264] ss:$9 sm:$0xff] %v1187
    %1366 = vst [vmem:[%s1266] ss:$9 sm:$0xff] %v1188
    %v1367 = vld [vmem:[#allocation1] sm:$0xff]
    %1368 = vst [vmem:[#allocation1] ss:$9 sm:$0xff] %v1189
    %1369 = vst [vmem:[%s1254] ss:$9 sm:$0xff] %v1190
    %1370 = vst [vmem:[%s1256] ss:$9 sm:$0xff] %v1191
    %1371 = vst [vmem:[%s1258] ss:$9 sm:$0xff] %v1192
    %1372 = vst [vmem:[%s1260] ss:$9 sm:$0xff] %v1193
    %1373 = vst [vmem:[%s1262] ss:$9 sm:$0xff] %v1194
    %1374 = vst [vmem:[%s1264] ss:$9 sm:$0xff] %v1195
    %1375 = vst [vmem:[%s1266] ss:$9 sm:$0xff] %v1196
    %v1376 = vld [vmem:[#allocation1] sm:$0xff]
    %1377 = vst [vmem:[#allocation1] ss:$9 sm:$0xff] %v1197
    %1378 = vst [vmem:[%s1254] ss:$9 sm:$0xff] %v1198
    %1379 = vst [vmem:[%s1256] ss:$9 sm:$0xff] %v1199
    %1380 = vst [vmem:[%s1258] ss:$9 sm:$0xff] %v1200
    %1381 = vst [vmem:[%s1260] ss:$9 sm:$0xff] %v1201
    %1382 = vst [vmem:[%s1262] ss:$9 sm:$0xff] %v1202
    %1383 = vst [vmem:[%s1264] ss:$9 sm:$0xff] %v1203
    %1384 = vst [vmem:[%s1266] ss:$9 sm:$0xff] %v1204
    %v1385 = vld [vmem:[#allocation1] sm:$0xff]
    %1386 = vst [vmem:[#allocation1] ss:$9 sm:$0xff] %v1205
    %1387 = vst [vmem:[%s1254] ss:$9 sm:$0xff] %v1206
    %1388 = vst [vmem:[%s1256] ss:$9 sm:$0xff] %v1207
    %1389 = vst [vmem:[%s1258] ss:$9 sm:$0xff] %v1208
    %1390 = vst [vmem:[%s1260] ss:$9 sm:$0xff] %v1209
    %1391 = vst [vmem:[%s1262] ss:$9 sm:$0xff] %v1210
    %1392 = vst [vmem:[%s1264] ss:$9 sm:$0xff] %v1211
    %1393 = vst [vmem:[%s1266] ss:$9 sm:$0xff] %v1212
    %v1394 = vld [vmem:[#allocation1] sm:$0xff]
    %1395 = vst [vmem:[#allocation1] ss:$9 sm:$0xff] %v1213
    %1396 = vst [vmem:[%s1254] ss:$9 sm:$0xff] %v1214
    %1397 = vst [vmem:[%s1256] ss:$9 sm:$0xff] %v1215
    %1398 = vst [vmem:[%s1258] ss:$9 sm:$0xff] %v1216
    %1399 = vst [vmem:[%s1260] ss:$9 sm:$0xff] %v1217
    %1400 = vst [vmem:[%s1262] ss:$9 sm:$0xff] %v1218
    %1401 = vst [vmem:[%s1264] ss:$9 sm:$0xff] %v1219
    %1402 = vst [vmem:[%s1266] ss:$9 sm:$0xff] %v1220
    %v1403 = vld [vmem:[#allocation1] sm:$0xff]
    %1404 = vst [vmem:[#allocation1] ss:$9 sm:$0xff] %v1221
    %1405 = vst [vmem:[%s1254] ss:$9 sm:$0xff] %v1222
    %1406 = vst [vmem:[%s1256] ss:$9 sm:$0xff] %v1223
    %1407 = vst [vmem:[%s1258] ss:$9 sm:$0xff] %v1224
    %1408 = vst [vmem:[%s1260] ss:$9 sm:$0xff] %v1225
    %1409 = vst [vmem:[%s1262] ss:$9 sm:$0xff] %v1226
    %1410 = vst [vmem:[%s1264] ss:$9 sm:$0xff] %v1227
    %1411 = vst [vmem:[%s1266] ss:$9 sm:$0xff] %v1228
    %v1412 = vld [vmem:[#allocation1] sm:$0xff]
    %1413 = vst [vmem:[#allocation1] ss:$9 sm:$0xff] %v1229
    %1414 = vst [vmem:[%s1254] ss:$9 sm:$0xff] %v1230
    %1415 = vst [vmem:[%s1256] ss:$9 sm:$0xff] %v1231
    %1416 = vst [vmem:[%s1258] ss:$9 sm:$0xff] %v1232
    %1417 = vst [vmem:[%s1260] ss:$9 sm:$0xff] %v1233
    %1418 = vst [vmem:[%s1262] ss:$9 sm:$0xff] %v1234
    %1419 = vst [vmem:[%s1264] ss:$9 sm:$0xff] %v1235
    %1420 = vst [vmem:[%s1266] ss:$9 sm:$0xff] %v1236
    %v1421 = vld [vmem:[#allocation1] sm:$0xff]
    %1422 = vst [vmem:[#allocation1] ss:$9 sm:$0xff] %v1237
    %1423 = vst [vmem:[%s1254] ss:$9 sm:$0xff] %v1238
    %1424 = vst [vmem:[%s1256] ss:$9 sm:$0xff] %v1239
    %1425 = vst [vmem:[%s1258] ss:$9 sm:$0xff] %v1240
    %1426 = vst [vmem:[%s1260] ss:$9 sm:$0xff] %v1241
    %1427 = vst [vmem:[%s1262] ss:$9 sm:$0xff] %v1242
    %1428 = vst [vmem:[%s1264] ss:$9 sm:$0xff] %v1243
    %1429 = vst [vmem:[%s1266] ss:$9 sm:$0xff] %v1244
    %v1430 = vld [vmem:[#allocation1] sm:$0xff]
    %1431 = vst [vmem:[#allocation1] ss:$9 sm:$0xff] %v1245
    %1432 = vst [vmem:[%s1254] ss:$9 sm:$0xff] %v1246
    %1433 = vst [vmem:[%s1256] ss:$9 sm:$0xff] %v1247
    %1434 = vst [vmem:[%s1258] ss:$9 sm:$0xff] %v1248
    %1435 = vst [vmem:[%s1260] ss:$9 sm:$0xff] %v1249
    %1436 = vst [vmem:[%s1262] ss:$9 sm:$0xff] %v1250
    %1437 = vst [vmem:[%s1264] ss:$9 sm:$0xff] %v1251
    %1438 = vst [vmem:[%s1266] ss:$9 sm:$0xff] %v1252
    %v1439 = vld [vmem:[#allocation1] sm:$0xff]
    %1440 = vset.pattern.permute.xlu0 0
    %1441 = vperm.xlu0 %1440, %v1268
    %v1442 = vpop.permute.xlu0 %1441
    %1443 = vset.pattern.permute.xlu0 0
    %1444 = vperm.xlu0 %1443, %v1277
    %v1445 = vpop.permute.xlu0 %1444
    %1446 = vset.pattern.permute.xlu0 0
    %1447 = vperm.xlu0 %1446, %v1286
    %v1448 = vpop.permute.xlu0 %1447
    %1449 = vset.pattern.permute.xlu0 0
    %1450 = vperm.xlu0 %1449, %v1295
    %v1451 = vpop.permute.xlu0 %1450
    %1452 = vset.pattern.permute.xlu0 0
    %1453 = vperm.xlu0 %1452, %v1304
    %v1454 = vpop.permute.xlu0 %1453
    %1455 = vset.pattern.permute.xlu0 0
    %1456 = vperm.xlu0 %1455, %v1313
    %v1457 = vpop.permute.xlu0 %1456
    %1458 = vset.pattern.permute.xlu0 0
    %1459 = vperm.xlu0 %1458, %v1322
    %v1460 = vpop.permute.xlu0 %1459
    %1461 = vset.pattern.permute.xlu0 0
    %1462 = vperm.xlu0 %1461, %v1331
    %v1463 = vpop.permute.xlu0 %1462
    %1464 = vset.pattern.permute.xlu0 0
    %1465 = vperm.xlu0 %1464, %v1340
    %v1466 = vpop.permute.xlu0 %1465
    %1467 = vset.pattern.permute.xlu0 0
    %1468 = vperm.xlu0 %1467, %v1349
    %v1469 = vpop.permute.xlu0 %1468
    %1470 = vset.pattern.permute.xlu0 0
    %1471 = vperm.xlu0 %1470, %v1358
    %v1472 = vpop.permute.xlu0 %1471
    %1473 = vset.pattern.permute.xlu0 0
    %1474 = vperm.xlu0 %1473, %v1367
    %v1475 = vpop.permute.xlu0 %1474
    %1476 = vset.pattern.permute.xlu0 0
    %1477 = vperm.xlu0 %1476, %v1376
    %v1478 = vpop.permute.xlu0 %1477
    %1479 = vset.pattern.permute.xlu0 0
    %1480 = vperm.xlu0 %1479, %v1385
    %v1481 = vpop.permute.xlu0 %1480
    %1482 = vset.pattern.permute.xlu0 0
    %1483 = vperm.xlu0 %1482, %v1394
    %v1484 = vpop.permute.xlu0 %1483
    %1485 = vset.pattern.permute.xlu0 0
    %1486 = vperm.xlu0 %1485, %v1403
    %v1487 = vpop.permute.xlu0 %1486
    %1488 = vset.pattern.permute.xlu0 0
    %1489 = vperm.xlu0 %1488, %v1412
    %v1490 = vpop.permute.xlu0 %1489
    %1491 = vset.pattern.permute.xlu0 0
    %1492 = vperm.xlu0 %1491, %v1421
    %v1493 = vpop.permute.xlu0 %1492
    %1494 = vset.pattern.permute.xlu0 0
    %1495 = vperm.xlu0 %1494, %v1430
    %v1496 = vpop.permute.xlu0 %1495
    %1497 = vset.pattern.permute.xlu0 0
    %1498 = vperm.xlu0 %1497, %v1439
    %v1499 = vpop.permute.xlu0 %1498
    %v1500 = vperm.slane %v1442, %v63
    %v1501 = vadd.s32 %v63, 4294967288
    %v1502 = vperm.slane %v1445, %v1501
    %vm1503 = vcmask 130112
    %v1504 = vsel %vm1503, %v1502, %v1500
    %v1505 = vadd.s32 %v63, 4294967280
    %v1506 = vperm.slane %v1448, %v1505
    %vm1507 = vcmask 195712
    %v1508 = vsel %vm1507, %v1506, %v1504
    %v1509 = vadd.s32 %v63, 4294967272
    %v1510 = vperm.slane %v1451, %v1509
    %vm1511 = vcmask 261312
    %v1512 = vsel %vm1511, %v1510, %v1508
    %v1513 = vadd.s32 %v63, 4294967264
    %v1514 = vperm.slane %v1454, %v1513
    %vm1515 = vcmask 326912
    %v1516 = vsel %vm1515, %v1514, %v1512
    %v1517 = vadd.s32 %v63, 4294967256
    %v1518 = vperm.slane %v1457, %v1517
    %vm1519 = vcmask 392512
    %v1520 = vsel %vm1519, %v1518, %v1516
    %v1521 = vadd.s32 %v63, 4294967248
    %v1522 = vperm.slane %v1460, %v1521
    %vm1523 = vcmask 458112
    %v1524 = vsel %vm1523, %v1522, %v1520
    %v1525 = vadd.s32 %v63, 4294967240
    %v1526 = vperm.slane %v1463, %v1525
    %vm1527 = vcmask 523712
    %v1528 = vsel %vm1527, %v1526, %v1524
    %v1529 = vadd.s32 %v63, 4294967232
    %v1530 = vperm.slane %v1466, %v1529
    %vm1531 = vcmask 589312
    %v1532 = vsel %vm1531, %v1530, %v1528
    %v1533 = vadd.s32 %v63, 4294967224
    %v1534 = vperm.slane %v1469, %v1533
    %vm1535 = vcmask 654912
    %v1536 = vsel %vm1535, %v1534, %v1532
    %v1537 = vadd.s32 %v63, 4294967216
    %v1538 = vperm.slane %v1472, %v1537
    %vm1539 = vcmask 720512
    %v1540 = vsel %vm1539, %v1538, %v1536
    %v1541 = vadd.s32 %v63, 4294967208
    %v1542 = vperm.slane %v1475, %v1541
    %vm1543 = vcmask 786112
    %v1544 = vsel %vm1543, %v1542, %v1540
    %v1545 = vadd.s32 %v63, 4294967200
    %v1546 = vperm.slane %v1478, %v1545
    %vm1547 = vcmask 851712
    %v1548 = vsel %vm1547, %v1546, %v1544
    %v1549 = vadd.s32 %v63, 4294967192
    %v1550 = vperm.slane %v1481, %v1549
    %vm1551 = vcmask 917312
    %v1552 = vsel %vm1551, %v1550, %v1548
    %v1553 = vadd.s32 %v63, 4294967184
    %v1554 = vperm.slane %v1484, %v1553
    %vm1555 = vcmask 982912
    %v1556 = vsel %vm1555, %v1554, %v1552
    %v1557 = vadd.s32 %v63, 4294967176
    %v1558 = vperm.slane %v1487, %v1557
    %vm1559 = vcmask 1048512
    %v1560 = vsel %vm1559, %v1558, %v1556
    %v1561 = vperm.slane %v1490, %v63
    %v1562 = vperm.slane %v1493, %v1501
    %v1563 = vsel %vm1503, %v1562, %v1561
    %v1564 = vperm.slane %v1496, %v1505
    %v1565 = vsel %vm1507, %v1564, %v1563
    %v1566 = vperm.slane %v1499, %v1509
    %v1567 = vsel %vm1511, %v1566, %v1565
    %v1568 = vrot.slane %v1567, 7
    %vm1569 = vcmask 1040384
    %v1570 = vsel %vm1569, %v1560, %v1568
    %v1572 = vlaneseq
    %vm1573 = vcmp.ge.s32.totalorder %v1572, 0
    %vm1574 = vcmp.lt.s32.totalorder %v1572, 160
    %vm1575 = vmand %vm1573, %vm1574
    %1576 = vst.msk [vmem:[#allocation8] ss:$4 sm:$0x3] %vm1575, %v1570
    %v1577 = vld [vmem:[#allocation7 + $0x8] sm:$0xff]
    %v1578 = vld [vmem:[#allocation7 + $0x20] sm:$0xff]
    %v1579 = vld [vmem:[#allocation7 + $0x38] sm:$0xff]
    %v1580 = vld [vmem:[#allocation7 + $0x50] sm:$0xff]
    %v1581 = vld [vmem:[#allocation7 + $0x68] sm:$0xff]
    %v1582 = vld [vmem:[#allocation7 + $0x80] sm:$0xff]
    %v1583 = vld [vmem:[#allocation7 + $0x98] sm:$0xff]
    %v1584 = vld [vmem:[#allocation7 + $0xb0] sm:$0xff]
    %v1585 = vld [vmem:[#allocation7 + $0xc8] sm:$0xff]
    %v1586 = vld [vmem:[#allocation7 + $0xe0] sm:$0xff]
    %v1587 = vld [vmem:[#allocation7 + $0xf8] sm:$0xff]
    %v1588 = vld [vmem:[#allocation7 + $0x110] sm:$0xff]
    %v1589 = vld [vmem:[#allocation7 + $0x128] sm:$0xff]
    %v1590 = vld [vmem:[#allocation7 + $0x140] sm:$0xff]
    %v1591 = vld [vmem:[#allocation7 + $0x158] sm:$0xff]
    %v1592 = vld [vmem:[#allocation7 + $0x170] sm:$0xff]
    %v1593 = vld [vmem:[#allocation7 + $0x188] sm:$0xff]
    %v1594 = vld [vmem:[#allocation7 + $0x1a0] sm:$0xff]
    %v1595 = vld [vmem:[#allocation7 + $0x1b8] sm:$0xff]
    %v1596 = vld [vmem:[#allocation7 + $0x1d0] sm:$0xff]
    %v1597 = vmul.f32 %v1577, %v973
    %v1598 = vmul.f32 %v1578, %v974
    %v1599 = vmul.f32 %v1579, %v975
    %v1600 = vmul.f32 %v1580, %v976
    %v1601 = vmul.f32 %v1581, %v977
    %v1602 = vmul.f32 %v1582, %v978
    %v1603 = vmul.f32 %v1583, %v979
    %v1604 = vmul.f32 %v1584, %v980
    %v1605 = vmul.f32 %v1585, %v981
    %v1606 = vmul.f32 %v1586, %v982
    %v1607 = vmul.f32 %v1587, %v983
    %v1608 = vmul.f32 %v1588, %v984
    %v1609 = vmul.f32 %v1589, %v985
    %v1610 = vmul.f32 %v1590, %v986
    %v1611 = vmul.f32 %v1591, %v987
    %v1612 = vmul.f32 %v1592, %v988
    %v1613 = vmul.f32 %v1593, %v989
    %v1614 = vmul.f32 %v1594, %v990
    %v1615 = vmul.f32 %v1595, %v991
    %v1616 = vmul.f32 %v1596, %v992
    %1617 = vadd.xlane.f32.xlu0 %v1597
    %v1618 = vpop.xlane.xlu0 %1617
    %1619 = vadd.xlane.f32.xlu0 %v1598
    %v1620 = vpop.xlane.xlu0 %1619
    %1621 = vadd.xlane.f32.xlu0 %v1599
    %v1622 = vpop.xlane.xlu0 %1621
    %1623 = vadd.xlane.f32.xlu0 %v1600
    %v1624 = vpop.xlane.xlu0 %1623
    %1625 = vadd.xlane.f32.xlu0 %v1601
    %v1626 = vpop.xlane.xlu0 %1625
    %1627 = vadd.xlane.f32.xlu0 %v1602
    %v1628 = vpop.xlane.xlu0 %1627
    %1629 = vadd.xlane.f32.xlu0 %v1603
    %v1630 = vpop.xlane.xlu0 %1629
    %1631 = vadd.xlane.f32.xlu0 %v1604
    %v1632 = vpop.xlane.xlu0 %1631
    %1633 = vadd.xlane.f32.xlu0 %v1605
    %v1634 = vpop.xlane.xlu0 %1633
    %1635 = vadd.xlane.f32.xlu0 %v1606
    %v1636 = vpop.xlane.xlu0 %1635
    %1637 = vadd.xlane.f32.xlu0 %v1607
    %v1638 = vpop.xlane.xlu0 %1637
    %1639 = vadd.xlane.f32.xlu0 %v1608
    %v1640 = vpop.xlane.xlu0 %1639
    %1641 = vadd.xlane.f32.xlu0 %v1609
    %v1642 = vpop.xlane.xlu0 %1641
    %1643 = vadd.xlane.f32.xlu0 %v1610
    %v1644 = vpop.xlane.xlu0 %1643
    %1645 = vadd.xlane.f32.xlu0 %v1611
    %v1646 = vpop.xlane.xlu0 %1645
    %1647 = vadd.xlane.f32.xlu0 %v1612
    %v1648 = vpop.xlane.xlu0 %1647
    %1649 = vadd.xlane.f32.xlu0 %v1613
    %v1650 = vpop.xlane.xlu0 %1649
    %1651 = vadd.xlane.f32.xlu0 %v1614
    %v1652 = vpop.xlane.xlu0 %1651
    %1653 = vadd.xlane.f32.xlu0 %v1615
    %v1654 = vpop.xlane.xlu0 %1653
    %1655 = vadd.xlane.f32.xlu0 %v1616
    %v1656 = vpop.xlane.xlu0 %1655
    %v1677 = vperm.slane %v1618, 0
    %v1678 = vperm.slane %v1618, 1
    %v1679 = vperm.slane %v1618, 2
    %v1680 = vperm.slane %v1618, 3
    %v1681 = vperm.slane %v1618, 4
    %v1682 = vperm.slane %v1618, 5
    %v1683 = vperm.slane %v1618, 6
    %v1684 = vperm.slane %v1618, 7
    %v1685 = vperm.slane %v1620, 0
    %v1686 = vperm.slane %v1620, 1
    %v1687 = vperm.slane %v1620, 2
    %v1688 = vperm.slane %v1620, 3
    %v1689 = vperm.slane %v1620, 4
    %v1690 = vperm.slane %v1620, 5
    %v1691 = vperm.slane %v1620, 6
    %v1692 = vperm.slane %v1620, 7
    %v1693 = vperm.slane %v1622, 0
    %v1694 = vperm.slane %v1622, 1
    %v1695 = vperm.slane %v1622, 2
    %v1696 = vperm.slane %v1622, 3
    %v1697 = vperm.slane %v1622, 4
    %v1698 = vperm.slane %v1622, 5
    %v1699 = vperm.slane %v1622, 6
    %v1700 = vperm.slane %v1622, 7
    %v1701 = vperm.slane %v1624, 0
    %v1702 = vperm.slane %v1624, 1
    %v1703 = vperm.slane %v1624, 2
    %v1704 = vperm.slane %v1624, 3
    %v1705 = vperm.slane %v1624, 4
    %v1706 = vperm.slane %v1624, 5
    %v1707 = vperm.slane %v1624, 6
    %v1708 = vperm.slane %v1624, 7
    %v1709 = vperm.slane %v1626, 0
    %v1710 = vperm.slane %v1626, 1
    %v1711 = vperm.slane %v1626, 2
    %v1712 = vperm.slane %v1626, 3
    %v1713 = vperm.slane %v1626, 4
    %v1714 = vperm.slane %v1626, 5
    %v1715 = vperm.slane %v1626, 6
    %v1716 = vperm.slane %v1626, 7
    %v1717 = vperm.slane %v1628, 0
    %v1718 = vperm.slane %v1628, 1
    %v1719 = vperm.slane %v1628, 2
    %v1720 = vperm.slane %v1628, 3
    %v1721 = vperm.slane %v1628, 4
    %v1722 = vperm.slane %v1628, 5
    %v1723 = vperm.slane %v1628, 6
    %v1724 = vperm.slane %v1628, 7
    %v1725 = vperm.slane %v1630, 0
    %v1726 = vperm.slane %v1630, 1
    %v1727 = vperm.slane %v1630, 2
    %v1728 = vperm.slane %v1630, 3
    %v1729 = vperm.slane %v1630, 4
    %v1730 = vperm.slane %v1630, 5
    %v1731 = vperm.slane %v1630, 6
    %v1732 = vperm.slane %v1630, 7
    %v1733 = vperm.slane %v1632, 0
    %v1734 = vperm.slane %v1632, 1
    %v1735 = vperm.slane %v1632, 2
    %v1736 = vperm.slane %v1632, 3
    %v1737 = vperm.slane %v1632, 4
    %v1738 = vperm.slane %v1632, 5
    %v1739 = vperm.slane %v1632, 6
    %v1740 = vperm.slane %v1632, 7
    %v1741 = vperm.slane %v1634, 0
    %v1742 = vperm.slane %v1634, 1
    %v1743 = vperm.slane %v1634, 2
    %v1744 = vperm.slane %v1634, 3
    %v1745 = vperm.slane %v1634, 4
    %v1746 = vperm.slane %v1634, 5
    %v1747 = vperm.slane %v1634, 6
    %v1748 = vperm.slane %v1634, 7
    %v1749 = vperm.slane %v1636, 0
    %v1750 = vperm.slane %v1636, 1
    %v1751 = vperm.slane %v1636, 2
    %v1752 = vperm.slane %v1636, 3
    %v1753 = vperm.slane %v1636, 4
    %v1754 = vperm.slane %v1636, 5
    %v1755 = vperm.slane %v1636, 6
    %v1756 = vperm.slane %v1636, 7
    %v1757 = vperm.slane %v1638, 0
    %v1758 = vperm.slane %v1638, 1
    %v1759 = vperm.slane %v1638, 2
    %v1760 = vperm.slane %v1638, 3
    %v1761 = vperm.slane %v1638, 4
    %v1762 = vperm.slane %v1638, 5
    %v1763 = vperm.slane %v1638, 6
    %v1764 = vperm.slane %v1638, 7
    %v1765 = vperm.slane %v1640, 0
    %v1766 = vperm.slane %v1640, 1
    %v1767 = vperm.slane %v1640, 2
    %v1768 = vperm.slane %v1640, 3
    %v1769 = vperm.slane %v1640, 4
    %v1770 = vperm.slane %v1640, 5
    %v1771 = vperm.slane %v1640, 6
    %v1772 = vperm.slane %v1640, 7
    %v1773 = vperm.slane %v1642, 0
    %v1774 = vperm.slane %v1642, 1
    %v1775 = vperm.slane %v1642, 2
    %v1776 = vperm.slane %v1642, 3
    %v1777 = vperm.slane %v1642, 4
    %v1778 = vperm.slane %v1642, 5
    %v1779 = vperm.slane %v1642, 6
    %v1780 = vperm.slane %v1642, 7
    %v1781 = vperm.slane %v1644, 0
    %v1782 = vperm.slane %v1644, 1
    %v1783 = vperm.slane %v1644, 2
    %v1784 = vperm.slane %v1644, 3
    %v1785 = vperm.slane %v1644, 4
    %v1786 = vperm.slane %v1644, 5
    %v1787 = vperm.slane %v1644, 6
    %v1788 = vperm.slane %v1644, 7
    %v1789 = vperm.slane %v1646, 0
    %v1790 = vperm.slane %v1646, 1
    %v1791 = vperm.slane %v1646, 2
    %v1792 = vperm.slane %v1646, 3
    %v1793 = vperm.slane %v1646, 4
    %v1794 = vperm.slane %v1646, 5
    %v1795 = vperm.slane %v1646, 6
    %v1796 = vperm.slane %v1646, 7
    %v1797 = vperm.slane %v1648, 0
    %v1798 = vperm.slane %v1648, 1
    %v1799 = vperm.slane %v1648, 2
    %v1800 = vperm.slane %v1648, 3
    %v1801 = vperm.slane %v1648, 4
    %v1802 = vperm.slane %v1648, 5
    %v1803 = vperm.slane %v1648, 6
    %v1804 = vperm.slane %v1648, 7
    %v1805 = vperm.slane %v1650, 0
    %v1806 = vperm.slane %v1650, 1
    %v1807 = vperm.slane %v1650, 2
    %v1808 = vperm.slane %v1650, 3
    %v1809 = vperm.slane %v1650, 4
    %v1810 = vperm.slane %v1650, 5
    %v1811 = vperm.slane %v1650, 6
    %v1812 = vperm.slane %v1650, 7
    %v1813 = vperm.slane %v1652, 0
    %v1814 = vperm.slane %v1652, 1
    %v1815 = vperm.slane %v1652, 2
    %v1816 = vperm.slane %v1652, 3
    %v1817 = vperm.slane %v1652, 4
    %v1818 = vperm.slane %v1652, 5
    %v1819 = vperm.slane %v1652, 6
    %v1820 = vperm.slane %v1652, 7
    %v1821 = vperm.slane %v1654, 0
    %v1822 = vperm.slane %v1654, 1
    %v1823 = vperm.slane %v1654, 2
    %v1824 = vperm.slane %v1654, 3
    %v1825 = vperm.slane %v1654, 4
    %v1826 = vperm.slane %v1654, 5
    %v1827 = vperm.slane %v1654, 6
    %v1828 = vperm.slane %v1654, 7
    %v1829 = vperm.slane %v1656, 0
    %v1830 = vperm.slane %v1656, 1
    %v1831 = vperm.slane %v1656, 2
    %v1832 = vperm.slane %v1656, 3
    %v1833 = vperm.slane %v1656, 4
    %v1834 = vperm.slane %v1656, 5
    %v1835 = vperm.slane %v1656, 6
    %v1836 = vperm.slane %v1656, 7
    %1837 = vst [vmem:[#allocation1] ss:$9 sm:$0xff] %v1677
    %s1838 = scalar_lea.vmem [#allocation1], 1
    %1839 = vst [vmem:[%s1838] ss:$9 sm:$0xff] %v1678
    %s1840 = scalar_lea.vmem [#allocation1], 2
    %1841 = vst [vmem:[%s1840] ss:$9 sm:$0xff] %v1679
    %s1842 = scalar_lea.vmem [#allocation1], 3
    %1843 = vst [vmem:[%s1842] ss:$9 sm:$0xff] %v1680
    %s1844 = scalar_lea.vmem [#allocation1], 4
    %1845 = vst [vmem:[%s1844] ss:$9 sm:$0xff] %v1681
    %s1846 = scalar_lea.vmem [#allocation1], 5
    %1847 = vst [vmem:[%s1846] ss:$9 sm:$0xff] %v1682
    %s1848 = scalar_lea.vmem [#allocation1], 6
    %1849 = vst [vmem:[%s1848] ss:$9 sm:$0xff] %v1683
    %s1850 = scalar_lea.vmem [#allocation1], 7
    %1851 = vst [vmem:[%s1850] ss:$9 sm:$0xff] %v1684
    %v1852 = vld [vmem:[#allocation1] sm:$0xff]
    %1853 = vst [vmem:[#allocation1] ss:$9 sm:$0xff] %v1685
    %1854 = vst [vmem:[%s1838] ss:$9 sm:$0xff] %v1686
    %1855 = vst [vmem:[%s1840] ss:$9 sm:$0xff] %v1687
    %1856 = vst [vmem:[%s1842] ss:$9 sm:$0xff] %v1688
    %1857 = vst [vmem:[%s1844] ss:$9 sm:$0xff] %v1689
    %1858 = vst [vmem:[%s1846] ss:$9 sm:$0xff] %v1690
    %1859 = vst [vmem:[%s1848] ss:$9 sm:$0xff] %v1691
    %1860 = vst [vmem:[%s1850] ss:$9 sm:$0xff] %v1692
    %v1861 = vld [vmem:[#allocation1] sm:$0xff]
    %1862 = vst [vmem:[#allocation1] ss:$9 sm:$0xff] %v1693
    %1863 = vst [vmem:[%s1838] ss:$9 sm:$0xff] %v1694
    %1864 = vst [vmem:[%s1840] ss:$9 sm:$0xff] %v1695
    %1865 = vst [vmem:[%s1842] ss:$9 sm:$0xff] %v1696
    %1866 = vst [vmem:[%s1844] ss:$9 sm:$0xff] %v1697
    %1867 = vst [vmem:[%s1846] ss:$9 sm:$0xff] %v1698
    %1868 = vst [vmem:[%s1848] ss:$9 sm:$0xff] %v1699
    %1869 = vst [vmem:[%s1850] ss:$9 sm:$0xff] %v1700
    %v1870 = vld [vmem:[#allocation1] sm:$0xff]
    %1871 = vst [vmem:[#allocation1] ss:$9 sm:$0xff] %v1701
    %1872 = vst [vmem:[%s1838] ss:$9 sm:$0xff] %v1702
    %1873 = vst [vmem:[%s1840] ss:$9 sm:$0xff] %v1703
    %1874 = vst [vmem:[%s1842] ss:$9 sm:$0xff] %v1704
    %1875 = vst [vmem:[%s1844] ss:$9 sm:$0xff] %v1705
    %1876 = vst [vmem:[%s1846] ss:$9 sm:$0xff] %v1706
    %1877 = vst [vmem:[%s1848] ss:$9 sm:$0xff] %v1707
    %1878 = vst [vmem:[%s1850] ss:$9 sm:$0xff] %v1708
    %v1879 = vld [vmem:[#allocation1] sm:$0xff]
    %1880 = vst [vmem:[#allocation1] ss:$9 sm:$0xff] %v1709
    %1881 = vst [vmem:[%s1838] ss:$9 sm:$0xff] %v1710
    %1882 = vst [vmem:[%s1840] ss:$9 sm:$0xff] %v1711
    %1883 = vst [vmem:[%s1842] ss:$9 sm:$0xff] %v1712
    %1884 = vst [vmem:[%s1844] ss:$9 sm:$0xff] %v1713
    %1885 = vst [vmem:[%s1846] ss:$9 sm:$0xff] %v1714
    %1886 = vst [vmem:[%s1848] ss:$9 sm:$0xff] %v1715
    %1887 = vst [vmem:[%s1850] ss:$9 sm:$0xff] %v1716
    %v1888 = vld [vmem:[#allocation1] sm:$0xff]
    %1889 = vst [vmem:[#allocation1] ss:$9 sm:$0xff] %v1717
    %1890 = vst [vmem:[%s1838] ss:$9 sm:$0xff] %v1718
    %1891 = vst [vmem:[%s1840] ss:$9 sm:$0xff] %v1719
    %1892 = vst [vmem:[%s1842] ss:$9 sm:$0xff] %v1720
    %1893 = vst [vmem:[%s1844] ss:$9 sm:$0xff] %v1721
    %1894 = vst [vmem:[%s1846] ss:$9 sm:$0xff] %v1722
    %1895 = vst [vmem:[%s1848] ss:$9 sm:$0xff] %v1723
    %1896 = vst [vmem:[%s1850] ss:$9 sm:$0xff] %v1724
    %v1897 = vld [vmem:[#allocation1] sm:$0xff]
    %1898 = vst [vmem:[#allocation1] ss:$9 sm:$0xff] %v1725
    %1899 = vst [vmem:[%s1838] ss:$9 sm:$0xff] %v1726
    %1900 = vst [vmem:[%s1840] ss:$9 sm:$0xff] %v1727
    %1901 = vst [vmem:[%s1842] ss:$9 sm:$0xff] %v1728
    %1902 = vst [vmem:[%s1844] ss:$9 sm:$0xff] %v1729
    %1903 = vst [vmem:[%s1846] ss:$9 sm:$0xff] %v1730
    %1904 = vst [vmem:[%s1848] ss:$9 sm:$0xff] %v1731
    %1905 = vst [vmem:[%s1850] ss:$9 sm:$0xff] %v1732
    %v1906 = vld [vmem:[#allocation1] sm:$0xff]
    %1907 = vst [vmem:[#allocation1] ss:$9 sm:$0xff] %v1733
    %1908 = vst [vmem:[%s1838] ss:$9 sm:$0xff] %v1734
    %1909 = vst [vmem:[%s1840] ss:$9 sm:$0xff] %v1735
    %1910 = vst [vmem:[%s1842] ss:$9 sm:$0xff] %v1736
    %1911 = vst [vmem:[%s1844] ss:$9 sm:$0xff] %v1737
    %1912 = vst [vmem:[%s1846] ss:$9 sm:$0xff] %v1738
    %1913 = vst [vmem:[%s1848] ss:$9 sm:$0xff] %v1739
    %1914 = vst [vmem:[%s1850] ss:$9 sm:$0xff] %v1740
    %v1915 = vld [vmem:[#allocation1] sm:$0xff]
    %1916 = vst [vmem:[#allocation1] ss:$9 sm:$0xff] %v1741
    %1917 = vst [vmem:[%s1838] ss:$9 sm:$0xff] %v1742
    %1918 = vst [vmem:[%s1840] ss:$9 sm:$0xff] %v1743
    %1919 = vst [vmem:[%s1842] ss:$9 sm:$0xff] %v1744
    %1920 = vst [vmem:[%s1844] ss:$9 sm:$0xff] %v1745
    %1921 = vst [vmem:[%s1846] ss:$9 sm:$0xff] %v1746
    %1922 = vst [vmem:[%s1848] ss:$9 sm:$0xff] %v1747
    %1923 = vst [vmem:[%s1850] ss:$9 sm:$0xff] %v1748
    %v1924 = vld [vmem:[#allocation1] sm:$0xff]
    %1925 = vst [vmem:[#allocation1] ss:$9 sm:$0xff] %v1749
    %1926 = vst [vmem:[%s1838] ss:$9 sm:$0xff] %v1750
    %1927 = vst [vmem:[%s1840] ss:$9 sm:$0xff] %v1751
    %1928 = vst [vmem:[%s1842] ss:$9 sm:$0xff] %v1752
    %1929 = vst [vmem:[%s1844] ss:$9 sm:$0xff] %v1753
    %1930 = vst [vmem:[%s1846] ss:$9 sm:$0xff] %v1754
    %1931 = vst [vmem:[%s1848] ss:$9 sm:$0xff] %v1755
    %1932 = vst [vmem:[%s1850] ss:$9 sm:$0xff] %v1756
    %v1933 = vld [vmem:[#allocation1] sm:$0xff]
    %1934 = vst [vmem:[#allocation1] ss:$9 sm:$0xff] %v1757
    %1935 = vst [vmem:[%s1838] ss:$9 sm:$0xff] %v1758
    %1936 = vst [vmem:[%s1840] ss:$9 sm:$0xff] %v1759
    %1937 = vst [vmem:[%s1842] ss:$9 sm:$0xff] %v1760
    %1938 = vst [vmem:[%s1844] ss:$9 sm:$0xff] %v1761
    %1939 = vst [vmem:[%s1846] ss:$9 sm:$0xff] %v1762
    %1940 = vst [vmem:[%s1848] ss:$9 sm:$0xff] %v1763
    %1941 = vst [vmem:[%s1850] ss:$9 sm:$0xff] %v1764
    %v1942 = vld [vmem:[#allocation1] sm:$0xff]
    %1943 = vst [vmem:[#allocation1] ss:$9 sm:$0xff] %v1765
    %1944 = vst [vmem:[%s1838] ss:$9 sm:$0xff] %v1766
    %1945 = vst [vmem:[%s1840] ss:$9 sm:$0xff] %v1767
    %1946 = vst [vmem:[%s1842] ss:$9 sm:$0xff] %v1768
    %1947 = vst [vmem:[%s1844] ss:$9 sm:$0xff] %v1769
    %1948 = vst [vmem:[%s1846] ss:$9 sm:$0xff] %v1770
    %1949 = vst [vmem:[%s1848] ss:$9 sm:$0xff] %v1771
    %1950 = vst [vmem:[%s1850] ss:$9 sm:$0xff] %v1772
    %v1951 = vld [vmem:[#allocation1] sm:$0xff]
    %1952 = vst [vmem:[#allocation1] ss:$9 sm:$0xff] %v1773
    %1953 = vst [vmem:[%s1838] ss:$9 sm:$0xff] %v1774
    %1954 = vst [vmem:[%s1840] ss:$9 sm:$0xff] %v1775
    %1955 = vst [vmem:[%s1842] ss:$9 sm:$0xff] %v1776
    %1956 = vst [vmem:[%s1844] ss:$9 sm:$0xff] %v1777
    %1957 = vst [vmem:[%s1846] ss:$9 sm:$0xff] %v1778
    %1958 = vst [vmem:[%s1848] ss:$9 sm:$0xff] %v1779
    %1959 = vst [vmem:[%s1850] ss:$9 sm:$0xff] %v1780
    %v1960 = vld [vmem:[#allocation1] sm:$0xff]
    %1961 = vst [vmem:[#allocation1] ss:$9 sm:$0xff] %v1781
    %1962 = vst [vmem:[%s1838] ss:$9 sm:$0xff] %v1782
    %1963 = vst [vmem:[%s1840] ss:$9 sm:$0xff] %v1783
    %1964 = vst [vmem:[%s1842] ss:$9 sm:$0xff] %v1784
    %1965 = vst [vmem:[%s1844] ss:$9 sm:$0xff] %v1785
    %1966 = vst [vmem:[%s1846] ss:$9 sm:$0xff] %v1786
    %1967 = vst [vmem:[%s1848] ss:$9 sm:$0xff] %v1787
    %1968 = vst [vmem:[%s1850] ss:$9 sm:$0xff] %v1788
    %v1969 = vld [vmem:[#allocation1] sm:$0xff]
    %1970 = vst [vmem:[#allocation1] ss:$9 sm:$0xff] %v1789
    %1971 = vst [vmem:[%s1838] ss:$9 sm:$0xff] %v1790
    %1972 = vst [vmem:[%s1840] ss:$9 sm:$0xff] %v1791
    %1973 = vst [vmem:[%s1842] ss:$9 sm:$0xff] %v1792
    %1974 = vst [vmem:[%s1844] ss:$9 sm:$0xff] %v1793
    %1975 = vst [vmem:[%s1846] ss:$9 sm:$0xff] %v1794
    %1976 = vst [vmem:[%s1848] ss:$9 sm:$0xff] %v1795
    %1977 = vst [vmem:[%s1850] ss:$9 sm:$0xff] %v1796
    %v1978 = vld [vmem:[#allocation1] sm:$0xff]
    %1979 = vst [vmem:[#allocation1] ss:$9 sm:$0xff] %v1797
    %1980 = vst [vmem:[%s1838] ss:$9 sm:$0xff] %v1798
    %1981 = vst [vmem:[%s1840] ss:$9 sm:$0xff] %v1799
    %1982 = vst [vmem:[%s1842] ss:$9 sm:$0xff] %v1800
    %1983 = vst [vmem:[%s1844] ss:$9 sm:$0xff] %v1801
    %1984 = vst [vmem:[%s1846] ss:$9 sm:$0xff] %v1802
    %1985 = vst [vmem:[%s1848] ss:$9 sm:$0xff] %v1803
    %1986 = vst [vmem:[%s1850] ss:$9 sm:$0xff] %v1804
    %v1987 = vld [vmem:[#allocation1] sm:$0xff]
    %1988 = vst [vmem:[#allocation1] ss:$9 sm:$0xff] %v1805
    %1989 = vst [vmem:[%s1838] ss:$9 sm:$0xff] %v1806
    %1990 = vst [vmem:[%s1840] ss:$9 sm:$0xff] %v1807
    %1991 = vst [vmem:[%s1842] ss:$9 sm:$0xff] %v1808
    %1992 = vst [vmem:[%s1844] ss:$9 sm:$0xff] %v1809
    %1993 = vst [vmem:[%s1846] ss:$9 sm:$0xff] %v1810
    %1994 = vst [vmem:[%s1848] ss:$9 sm:$0xff] %v1811
    %1995 = vst [vmem:[%s1850] ss:$9 sm:$0xff] %v1812
    %v1996 = vld [vmem:[#allocation1] sm:$0xff]
    %1997 = vst [vmem:[#allocation1] ss:$9 sm:$0xff] %v1813
    %1998 = vst [vmem:[%s1838] ss:$9 sm:$0xff] %v1814
    %1999 = vst [vmem:[%s1840] ss:$9 sm:$0xff] %v1815
    %2000 = vst [vmem:[%s1842] ss:$9 sm:$0xff] %v1816
    %2001 = vst [vmem:[%s1844] ss:$9 sm:$0xff] %v1817
    %2002 = vst [vmem:[%s1846] ss:$9 sm:$0xff] %v1818
    %2003 = vst [vmem:[%s1848] ss:$9 sm:$0xff] %v1819
    %2004 = vst [vmem:[%s1850] ss:$9 sm:$0xff] %v1820
    %v2005 = vld [vmem:[#allocation1] sm:$0xff]
    %2006 = vst [vmem:[#allocation1] ss:$9 sm:$0xff] %v1821
    %2007 = vst [vmem:[%s1838] ss:$9 sm:$0xff] %v1822
    %2008 = vst [vmem:[%s1840] ss:$9 sm:$0xff] %v1823
    %2009 = vst [vmem:[%s1842] ss:$9 sm:$0xff] %v1824
    %2010 = vst [vmem:[%s1844] ss:$9 sm:$0xff] %v1825
    %2011 = vst [vmem:[%s1846] ss:$9 sm:$0xff] %v1826
    %2012 = vst [vmem:[%s1848] ss:$9 sm:$0xff] %v1827
    %2013 = vst [vmem:[%s1850] ss:$9 sm:$0xff] %v1828
    %v2014 = vld [vmem:[#allocation1] sm:$0xff]
    %2015 = vst [vmem:[#allocation1] ss:$9 sm:$0xff] %v1829
    %2016 = vst [vmem:[%s1838] ss:$9 sm:$0xff] %v1830
    %2017 = vst [vmem:[%s1840] ss:$9 sm:$0xff] %v1831
    %2018 = vst [vmem:[%s1842] ss:$9 sm:$0xff] %v1832
    %2019 = vst [vmem:[%s1844] ss:$9 sm:$0xff] %v1833
    %2020 = vst [vmem:[%s1846] ss:$9 sm:$0xff] %v1834
    %2021 = vst [vmem:[%s1848] ss:$9 sm:$0xff] %v1835
    %2022 = vst [vmem:[%s1850] ss:$9 sm:$0xff] %v1836
    %v2023 = vld [vmem:[#allocation1] sm:$0xff]
    %2024 = vset.pattern.permute.xlu0 0
    %2025 = vperm.xlu0 %2024, %v1852
    %v2026 = vpop.permute.xlu0 %2025
    %2027 = vset.pattern.permute.xlu0 0
    %2028 = vperm.xlu0 %2027, %v1861
    %v2029 = vpop.permute.xlu0 %2028
    %2030 = vset.pattern.permute.xlu0 0
    %2031 = vperm.xlu0 %2030, %v1870
    %v2032 = vpop.permute.xlu0 %2031
    %2033 = vset.pattern.permute.xlu0 0
    %2034 = vperm.xlu0 %2033, %v1879
    %v2035 = vpop.permute.xlu0 %2034
    %2036 = vset.pattern.permute.xlu0 0
    %2037 = vperm.xlu0 %2036, %v1888
    %v2038 = vpop.permute.xlu0 %2037
    %2039 = vset.pattern.permute.xlu0 0
    %2040 = vperm.xlu0 %2039, %v1897
    %v2041 = vpop.permute.xlu0 %2040
    %2042 = vset.pattern.permute.xlu0 0
    %2043 = vperm.xlu0 %2042, %v1906
    %v2044 = vpop.permute.xlu0 %2043
    %2045 = vset.pattern.permute.xlu0 0
    %2046 = vperm.xlu0 %2045, %v1915
    %v2047 = vpop.permute.xlu0 %2046
    %2048 = vset.pattern.permute.xlu0 0
    %2049 = vperm.xlu0 %2048, %v1924
    %v2050 = vpop.permute.xlu0 %2049
    %2051 = vset.pattern.permute.xlu0 0
    %2052 = vperm.xlu0 %2051, %v1933
    %v2053 = vpop.permute.xlu0 %2052
    %2054 = vset.pattern.permute.xlu0 0
    %2055 = vperm.xlu0 %2054, %v1942
    %v2056 = vpop.permute.xlu0 %2055
    %2057 = vset.pattern.permute.xlu0 0
    %2058 = vperm.xlu0 %2057, %v1951
    %v2059 = vpop.permute.xlu0 %2058
    %2060 = vset.pattern.permute.xlu0 0
    %2061 = vperm.xlu0 %2060, %v1960
    %v2062 = vpop.permute.xlu0 %2061
    %2063 = vset.pattern.permute.xlu0 0
    %2064 = vperm.xlu0 %2063, %v1969
    %v2065 = vpop.permute.xlu0 %2064
    %2066 = vset.pattern.permute.xlu0 0
    %2067 = vperm.xlu0 %2066, %v1978
    %v2068 = vpop.permute.xlu0 %2067
    %2069 = vset.pattern.permute.xlu0 0
    %2070 = vperm.xlu0 %2069, %v1987
    %v2071 = vpop.permute.xlu0 %2070
    %2072 = vset.pattern.permute.xlu0 0
    %2073 = vperm.xlu0 %2072, %v1996
    %v2074 = vpop.permute.xlu0 %2073
    %2075 = vset.pattern.permute.xlu0 0
    %2076 = vperm.xlu0 %2075, %v2005
    %v2077 = vpop.permute.xlu0 %2076
    %2078 = vset.pattern.permute.xlu0 0
    %2079 = vperm.xlu0 %2078, %v2014
    %v2080 = vpop.permute.xlu0 %2079
    %2081 = vset.pattern.permute.xlu0 0
    %2082 = vperm.xlu0 %2081, %v2023
    %v2083 = vpop.permute.xlu0 %2082
    %v2084 = vperm.slane %v2026, %v63
    %v2085 = vperm.slane %v2029, %v1501
    %v2086 = vsel %vm1503, %v2085, %v2084
    %v2087 = vperm.slane %v2032, %v1505
    %v2088 = vsel %vm1507, %v2087, %v2086
    %v2089 = vperm.slane %v2035, %v1509
    %v2090 = vsel %vm1511, %v2089, %v2088
    %v2091 = vperm.slane %v2038, %v1513
    %v2092 = vsel %vm1515, %v2091, %v2090
    %v2093 = vperm.slane %v2041, %v1517
    %v2094 = vsel %vm1519, %v2093, %v2092
    %v2095 = vperm.slane %v2044, %v1521
    %v2096 = vsel %vm1523, %v2095, %v2094
    %v2097 = vperm.slane %v2047, %v1525
    %v2098 = vsel %vm1527, %v2097, %v2096
    %v2099 = vperm.slane %v2050, %v1529
    %v2100 = vsel %vm1531, %v2099, %v2098
    %v2101 = vperm.slane %v2053, %v1533
    %v2102 = vsel %vm1535, %v2101, %v2100
    %v2103 = vperm.slane %v2056, %v1537
    %v2104 = vsel %vm1539, %v2103, %v2102
    %v2105 = vperm.slane %v2059, %v1541
    %v2106 = vsel %vm1543, %v2105, %v2104
    %v2107 = vperm.slane %v2062, %v1545
    %v2108 = vsel %vm1547, %v2107, %v2106
    %v2109 = vperm.slane %v2065, %v1549
    %v2110 = vsel %vm1551, %v2109, %v2108
    %v2111 = vperm.slane %v2068, %v1553
    %v2112 = vsel %vm1555, %v2111, %v2110
    %v2113 = vperm.slane %v2071, %v1557
    %v2114 = vsel %vm1559, %v2113, %v2112
    %v2115 = vperm.slane %v2074, %v63
    %v2116 = vperm.slane %v2077, %v1501
    %v2117 = vsel %vm1503, %v2116, %v2115
    %v2118 = vperm.slane %v2080, %v1505
    %v2119 = vsel %vm1507, %v2118, %v2117
    %v2120 = vperm.slane %v2083, %v1509
    %v2121 = vsel %vm1511, %v2120, %v2119
    %v2122 = vrot.slane %v2121, 7
    %v2123 = vsel %vm1569, %v2114, %v2122
    %s2125 = scalar_lea.vmem [#allocation8], 1
    %2126 = vst.msk [vmem:[%s2125] ss:$4 sm:$0x3] %vm1575, %v2123
    %v2127 = vld [vmem:[#allocation7 + $0x10] sm:$0xff]
    %v2128 = vld [vmem:[#allocation7 + $0x28] sm:$0xff]
    %v2129 = vld [vmem:[#allocation7 + $0x40] sm:$0xff]
    %v2130 = vld [vmem:[#allocation7 + $0x58] sm:$0xff]
    %v2131 = vld [vmem:[#allocation7 + $0x70] sm:$0xff]
    %v2132 = vld [vmem:[#allocation7 + $0x88] sm:$0xff]
    %v2133 = vld [vmem:[#allocation7 + $0xa0] sm:$0xff]
    %v2134 = vld [vmem:[#allocation7 + $0xb8] sm:$0xff]
    %v2135 = vld [vmem:[#allocation7 + $0xd0] sm:$0xff]
    %v2136 = vld [vmem:[#allocation7 + $0xe8] sm:$0xff]
    %v2137 = vld [vmem:[#allocation7 + $0x100] sm:$0xff]
    %v2138 = vld [vmem:[#allocation7 + $0x118] sm:$0xff]
    %v2139 = vld [vmem:[#allocation7 + $0x130] sm:$0xff]
    %v2140 = vld [vmem:[#allocation7 + $0x148] sm:$0xff]
    %v2141 = vld [vmem:[#allocation7 + $0x160] sm:$0xff]
    %v2142 = vld [vmem:[#allocation7 + $0x178] sm:$0xff]
    %v2143 = vld [vmem:[#allocation7 + $0x190] sm:$0xff]
    %v2144 = vld [vmem:[#allocation7 + $0x1a8] sm:$0xff]
    %v2145 = vld [vmem:[#allocation7 + $0x1c0] sm:$0xff]
    %v2146 = vld [vmem:[#allocation7 + $0x1d8] sm:$0xff]
    %v2147 = vmul.f32 %v2127, %v973
    %v2148 = vmul.f32 %v2128, %v974
    %v2149 = vmul.f32 %v2129, %v975
    %v2150 = vmul.f32 %v2130, %v976
    %v2151 = vmul.f32 %v2131, %v977
    %v2152 = vmul.f32 %v2132, %v978
    %v2153 = vmul.f32 %v2133, %v979
    %v2154 = vmul.f32 %v2134, %v980
    %v2155 = vmul.f32 %v2135, %v981
    %v2156 = vmul.f32 %v2136, %v982
    %v2157 = vmul.f32 %v2137, %v983
    %v2158 = vmul.f32 %v2138, %v984
    %v2159 = vmul.f32 %v2139, %v985
    %v2160 = vmul.f32 %v2140, %v986
    %v2161 = vmul.f32 %v2141, %v987
    %v2162 = vmul.f32 %v2142, %v988
    %v2163 = vmul.f32 %v2143, %v989
    %v2164 = vmul.f32 %v2144, %v990
    %v2165 = vmul.f32 %v2145, %v991
    %v2166 = vmul.f32 %v2146, %v992
    %2167 = vadd.xlane.f32.xlu0 %v2147
    %v2168 = vpop.xlane.xlu0 %2167
    %2169 = vadd.xlane.f32.xlu0 %v2148
    %v2170 = vpop.xlane.xlu0 %2169
    %2171 = vadd.xlane.f32.xlu0 %v2149
    %v2172 = vpop.xlane.xlu0 %2171
    %2173 = vadd.xlane.f32.xlu0 %v2150
    %v2174 = vpop.xlane.xlu0 %2173
    %2175 = vadd.xlane.f32.xlu0 %v2151
    %v2176 = vpop.xlane.xlu0 %2175
    %2177 = vadd.xlane.f32.xlu0 %v2152
    %v2178 = vpop.xlane.xlu0 %2177
    %2179 = vadd.xlane.f32.xlu0 %v2153
    %v2180 = vpop.xlane.xlu0 %2179
    %2181 = vadd.xlane.f32.xlu0 %v2154
    %v2182 = vpop.xlane.xlu0 %2181
    %2183 = vadd.xlane.f32.xlu0 %v2155
    %v2184 = vpop.xlane.xlu0 %2183
    %2185 = vadd.xlane.f32.xlu0 %v2156
    %v2186 = vpop.xlane.xlu0 %2185
    %2187 = vadd.xlane.f32.xlu0 %v2157
    %v2188 = vpop.xlane.xlu0 %2187
    %2189 = vadd.xlane.f32.xlu0 %v2158
    %v2190 = vpop.xlane.xlu0 %2189
    %2191 = vadd.xlane.f32.xlu0 %v2159
    %v2192 = vpop.xlane.xlu0 %2191
    %2193 = vadd.xlane.f32.xlu0 %v2160
    %v2194 = vpop.xlane.xlu0 %2193
    %2195 = vadd.xlane.f32.xlu0 %v2161
    %v2196 = vpop.xlane.xlu0 %2195
    %2197 = vadd.xlane.f32.xlu0 %v2162
    %v2198 = vpop.xlane.xlu0 %2197
    %2199 = vadd.xlane.f32.xlu0 %v2163
    %v2200 = vpop.xlane.xlu0 %2199
    %2201 = vadd.xlane.f32.xlu0 %v2164
    %v2202 = vpop.xlane.xlu0 %2201
    %2203 = vadd.xlane.f32.xlu0 %v2165
    %v2204 = vpop.xlane.xlu0 %2203
    %2205 = vadd.xlane.f32.xlu0 %v2166
    %v2206 = vpop.xlane.xlu0 %2205
    %v2227 = vperm.slane %v2168, 0
    %v2228 = vperm.slane %v2168, 1
    %v2229 = vperm.slane %v2168, 2
    %v2230 = vperm.slane %v2168, 3
    %v2231 = vperm.slane %v2168, 4
    %v2232 = vperm.slane %v2168, 5
    %v2233 = vperm.slane %v2168, 6
    %v2234 = vperm.slane %v2168, 7
    %v2235 = vperm.slane %v2170, 0
    %v2236 = vperm.slane %v2170, 1
    %v2237 = vperm.slane %v2170, 2
    %v2238 = vperm.slane %v2170, 3
    %v2239 = vperm.slane %v2170, 4
    %v2240 = vperm.slane %v2170, 5
    %v2241 = vperm.slane %v2170, 6
    %v2242 = vperm.slane %v2170, 7
    %v2243 = vperm.slane %v2172, 0
    %v2244 = vperm.slane %v2172, 1
    %v2245 = vperm.slane %v2172, 2
    %v2246 = vperm.slane %v2172, 3
    %v2247 = vperm.slane %v2172, 4
    %v2248 = vperm.slane %v2172, 5
    %v2249 = vperm.slane %v2172, 6
    %v2250 = vperm.slane %v2172, 7
    %v2251 = vperm.slane %v2174, 0
    %v2252 = vperm.slane %v2174, 1
    %v2253 = vperm.slane %v2174, 2
    %v2254 = vperm.slane %v2174, 3
    %v2255 = vperm.slane %v2174, 4
    %v2256 = vperm.slane %v2174, 5
    %v2257 = vperm.slane %v2174, 6
    %v2258 = vperm.slane %v2174, 7
    %v2259 = vperm.slane %v2176, 0
    %v2260 = vperm.slane %v2176, 1
    %v2261 = vperm.slane %v2176, 2
    %v2262 = vperm.slane %v2176, 3
    %v2263 = vperm.slane %v2176, 4
    %v2264 = vperm.slane %v2176, 5
    %v2265 = vperm.slane %v2176, 6
    %v2266 = vperm.slane %v2176, 7
    %v2267 = vperm.slane %v2178, 0
    %v2268 = vperm.slane %v2178, 1
    %v2269 = vperm.slane %v2178, 2
    %v2270 = vperm.slane %v2178, 3
    %v2271 = vperm.slane %v2178, 4
    %v2272 = vperm.slane %v2178, 5
    %v2273 = vperm.slane %v2178, 6
    %v2274 = vperm.slane %v2178, 7
    %v2275 = vperm.slane %v2180, 0
    %v2276 = vperm.slane %v2180, 1
    %v2277 = vperm.slane %v2180, 2
    %v2278 = vperm.slane %v2180, 3
    %v2279 = vperm.slane %v2180, 4
    %v2280 = vperm.slane %v2180, 5
    %v2281 = vperm.slane %v2180, 6
    %v2282 = vperm.slane %v2180, 7
    %v2283 = vperm.slane %v2182, 0
    %v2284 = vperm.slane %v2182, 1
    %v2285 = vperm.slane %v2182, 2
    %v2286 = vperm.slane %v2182, 3
    %v2287 = vperm.slane %v2182, 4
    %v2288 = vperm.slane %v2182, 5
    %v2289 = vperm.slane %v2182, 6
    %v2290 = vperm.slane %v2182, 7
    %v2291 = vperm.slane %v2184, 0
    %v2292 = vperm.slane %v2184, 1
    %v2293 = vperm.slane %v2184, 2
    %v2294 = vperm.slane %v2184, 3
    %v2295 = vperm.slane %v2184, 4
    %v2296 = vperm.slane %v2184, 5
    %v2297 = vperm.slane %v2184, 6
    %v2298 = vperm.slane %v2184, 7
    %v2299 = vperm.slane %v2186, 0
    %v2300 = vperm.slane %v2186, 1
    %v2301 = vperm.slane %v2186, 2
    %v2302 = vperm.slane %v2186, 3
    %v2303 = vperm.slane %v2186, 4
    %v2304 = vperm.slane %v2186, 5
    %v2305 = vperm.slane %v2186, 6
    %v2306 = vperm.slane %v2186, 7
    %v2307 = vperm.slane %v2188, 0
    %v2308 = vperm.slane %v2188, 1
    %v2309 = vperm.slane %v2188, 2
    %v2310 = vperm.slane %v2188, 3
    %v2311 = vperm.slane %v2188, 4
    %v2312 = vperm.slane %v2188, 5
    %v2313 = vperm.slane %v2188, 6
    %v2314 = vperm.slane %v2188, 7
    %v2315 = vperm.slane %v2190, 0
    %v2316 = vperm.slane %v2190, 1
    %v2317 = vperm.slane %v2190, 2
    %v2318 = vperm.slane %v2190, 3
    %v2319 = vperm.slane %v2190, 4
    %v2320 = vperm.slane %v2190, 5
    %v2321 = vperm.slane %v2190, 6
    %v2322 = vperm.slane %v2190, 7
    %v2323 = vperm.slane %v2192, 0
    %v2324 = vperm.slane %v2192, 1
    %v2325 = vperm.slane %v2192, 2
    %v2326 = vperm.slane %v2192, 3
    %v2327 = vperm.slane %v2192, 4
    %v2328 = vperm.slane %v2192, 5
    %v2329 = vperm.slane %v2192, 6
    %v2330 = vperm.slane %v2192, 7
    %v2331 = vperm.slane %v2194, 0
    %v2332 = vperm.slane %v2194, 1
    %v2333 = vperm.slane %v2194, 2
    %v2334 = vperm.slane %v2194, 3
    %v2335 = vperm.slane %v2194, 4
    %v2336 = vperm.slane %v2194, 5
    %v2337 = vperm.slane %v2194, 6
    %v2338 = vperm.slane %v2194, 7
    %v2339 = vperm.slane %v2196, 0
    %v2340 = vperm.slane %v2196, 1
    %v2341 = vperm.slane %v2196, 2
    %v2342 = vperm.slane %v2196, 3
    %v2343 = vperm.slane %v2196, 4
    %v2344 = vperm.slane %v2196, 5
    %v2345 = vperm.slane %v2196, 6
    %v2346 = vperm.slane %v2196, 7
    %v2347 = vperm.slane %v2198, 0
    %v2348 = vperm.slane %v2198, 1
    %v2349 = vperm.slane %v2198, 2
    %v2350 = vperm.slane %v2198, 3
    %v2351 = vperm.slane %v2198, 4
    %v2352 = vperm.slane %v2198, 5
    %v2353 = vperm.slane %v2198, 6
    %v2354 = vperm.slane %v2198, 7
    %v2355 = vperm.slane %v2200, 0
    %v2356 = vperm.slane %v2200, 1
    %v2357 = vperm.slane %v2200, 2
    %v2358 = vperm.slane %v2200, 3
    %v2359 = vperm.slane %v2200, 4
    %v2360 = vperm.slane %v2200, 5
    %v2361 = vperm.slane %v2200, 6
    %v2362 = vperm.slane %v2200, 7
    %v2363 = vperm.slane %v2202, 0
    %v2364 = vperm.slane %v2202, 1
    %v2365 = vperm.slane %v2202, 2
    %v2366 = vperm.slane %v2202, 3
    %v2367 = vperm.slane %v2202, 4
    %v2368 = vperm.slane %v2202, 5
    %v2369 = vperm.slane %v2202, 6
    %v2370 = vperm.slane %v2202, 7
    %v2371 = vperm.slane %v2204, 0
    %v2372 = vperm.slane %v2204, 1
    %v2373 = vperm.slane %v2204, 2
    %v2374 = vperm.slane %v2204, 3
    %v2375 = vperm.slane %v2204, 4
    %v2376 = vperm.slane %v2204, 5
    %v2377 = vperm.slane %v2204, 6
    %v2378 = vperm.slane %v2204, 7
    %v2379 = vperm.slane %v2206, 0
    %v2380 = vperm.slane %v2206, 1
    %v2381 = vperm.slane %v2206, 2
    %v2382 = vperm.slane %v2206, 3
    %v2383 = vperm.slane %v2206, 4
    %v2384 = vperm.slane %v2206, 5
    %v2385 = vperm.slane %v2206, 6
    %v2386 = vperm.slane %v2206, 7
    %2387 = vst [vmem:[#allocation1] ss:$9 sm:$0xff] %v2227
    %s2388 = scalar_lea.vmem [#allocation1], 1
    %2389 = vst [vmem:[%s2388] ss:$9 sm:$0xff] %v2228
    %s2390 = scalar_lea.vmem [#allocation1], 2
    %2391 = vst [vmem:[%s2390] ss:$9 sm:$0xff] %v2229
    %s2392 = scalar_lea.vmem [#allocation1], 3
    %2393 = vst [vmem:[%s2392] ss:$9 sm:$0xff] %v2230
    %s2394 = scalar_lea.vmem [#allocation1], 4
    %2395 = vst [vmem:[%s2394] ss:$9 sm:$0xff] %v2231
    %s2396 = scalar_lea.vmem [#allocation1], 5
    %2397 = vst [vmem:[%s2396] ss:$9 sm:$0xff] %v2232
    %s2398 = scalar_lea.vmem [#allocation1], 6
    %2399 = vst [vmem:[%s2398] ss:$9 sm:$0xff] %v2233
    %s2400 = scalar_lea.vmem [#allocation1], 7
    %2401 = vst [vmem:[%s2400] ss:$9 sm:$0xff] %v2234
    %v2402 = vld [vmem:[#allocation1] sm:$0xff]
    %2403 = vst [vmem:[#allocation1] ss:$9 sm:$0xff] %v2235
    %2404 = vst [vmem:[%s2388] ss:$9 sm:$0xff] %v2236
    %2405 = vst [vmem:[%s2390] ss:$9 sm:$0xff] %v2237
    %2406 = vst [vmem:[%s2392] ss:$9 sm:$0xff] %v2238
    %2407 = vst [vmem:[%s2394] ss:$9 sm:$0xff] %v2239
    %2408 = vst [vmem:[%s2396] ss:$9 sm:$0xff] %v2240
    %2409 = vst [vmem:[%s2398] ss:$9 sm:$0xff] %v2241
    %2410 = vst [vmem:[%s2400] ss:$9 sm:$0xff] %v2242
    %v2411 = vld [vmem:[#allocation1] sm:$0xff]
    %2412 = vst [vmem:[#allocation1] ss:$9 sm:$0xff] %v2243
    %2413 = vst [vmem:[%s2388] ss:$9 sm:$0xff] %v2244
    %2414 = vst [vmem:[%s2390] ss:$9 sm:$0xff] %v2245
    %2415 = vst [vmem:[%s2392] ss:$9 sm:$0xff] %v2246
    %2416 = vst [vmem:[%s2394] ss:$9 sm:$0xff] %v2247
    %2417 = vst [vmem:[%s2396] ss:$9 sm:$0xff] %v2248
    %2418 = vst [vmem:[%s2398] ss:$9 sm:$0xff] %v2249
    %2419 = vst [vmem:[%s2400] ss:$9 sm:$0xff] %v2250
    %v2420 = vld [vmem:[#allocation1] sm:$0xff]
    %2421 = vst [vmem:[#allocation1] ss:$9 sm:$0xff] %v2251
    %2422 = vst [vmem:[%s2388] ss:$9 sm:$0xff] %v2252
    %2423 = vst [vmem:[%s2390] ss:$9 sm:$0xff] %v2253
    %2424 = vst [vmem:[%s2392] ss:$9 sm:$0xff] %v2254
    %2425 = vst [vmem:[%s2394] ss:$9 sm:$0xff] %v2255
    %2426 = vst [vmem:[%s2396] ss:$9 sm:$0xff] %v2256
    %2427 = vst [vmem:[%s2398] ss:$9 sm:$0xff] %v2257
    %2428 = vst [vmem:[%s2400] ss:$9 sm:$0xff] %v2258
    %v2429 = vld [vmem:[#allocation1] sm:$0xff]
    %2430 = vst [vmem:[#allocation1] ss:$9 sm:$0xff] %v2259
    %2431 = vst [vmem:[%s2388] ss:$9 sm:$0xff] %v2260
    %2432 = vst [vmem:[%s2390] ss:$9 sm:$0xff] %v2261
    %2433 = vst [vmem:[%s2392] ss:$9 sm:$0xff] %v2262
    %2434 = vst [vmem:[%s2394] ss:$9 sm:$0xff] %v2263
    %2435 = vst [vmem:[%s2396] ss:$9 sm:$0xff] %v2264
    %2436 = vst [vmem:[%s2398] ss:$9 sm:$0xff] %v2265
    %2437 = vst [vmem:[%s2400] ss:$9 sm:$0xff] %v2266
    %v2438 = vld [vmem:[#allocation1] sm:$0xff]
    %2439 = vst [vmem:[#allocation1] ss:$9 sm:$0xff] %v2267
    %2440 = vst [vmem:[%s2388] ss:$9 sm:$0xff] %v2268
    %2441 = vst [vmem:[%s2390] ss:$9 sm:$0xff] %v2269
    %2442 = vst [vmem:[%s2392] ss:$9 sm:$0xff] %v2270
    %2443 = vst [vmem:[%s2394] ss:$9 sm:$0xff] %v2271
    %2444 = vst [vmem:[%s2396] ss:$9 sm:$0xff] %v2272
    %2445 = vst [vmem:[%s2398] ss:$9 sm:$0xff] %v2273
    %2446 = vst [vmem:[%s2400] ss:$9 sm:$0xff] %v2274
    %v2447 = vld [vmem:[#allocation1] sm:$0xff]
    %2448 = vst [vmem:[#allocation1] ss:$9 sm:$0xff] %v2275
    %2449 = vst [vmem:[%s2388] ss:$9 sm:$0xff] %v2276
    %2450 = vst [vmem:[%s2390] ss:$9 sm:$0xff] %v2277
    %2451 = vst [vmem:[%s2392] ss:$9 sm:$0xff] %v2278
    %2452 = vst [vmem:[%s2394] ss:$9 sm:$0xff] %v2279
    %2453 = vst [vmem:[%s2396] ss:$9 sm:$0xff] %v2280
    %2454 = vst [vmem:[%s2398] ss:$9 sm:$0xff] %v2281
    %2455 = vst [vmem:[%s2400] ss:$9 sm:$0xff] %v2282
    %v2456 = vld [vmem:[#allocation1] sm:$0xff]
    %2457 = vst [vmem:[#allocation1] ss:$9 sm:$0xff] %v2283
    %2458 = vst [vmem:[%s2388] ss:$9 sm:$0xff] %v2284
    %2459 = vst [vmem:[%s2390] ss:$9 sm:$0xff] %v2285
    %2460 = vst [vmem:[%s2392] ss:$9 sm:$0xff] %v2286
    %2461 = vst [vmem:[%s2394] ss:$9 sm:$0xff] %v2287
    %2462 = vst [vmem:[%s2396] ss:$9 sm:$0xff] %v2288
    %2463 = vst [vmem:[%s2398] ss:$9 sm:$0xff] %v2289
    %2464 = vst [vmem:[%s2400] ss:$9 sm:$0xff] %v2290
    %v2465 = vld [vmem:[#allocation1] sm:$0xff]
    %2466 = vst [vmem:[#allocation1] ss:$9 sm:$0xff] %v2291
    %2467 = vst [vmem:[%s2388] ss:$9 sm:$0xff] %v2292
    %2468 = vst [vmem:[%s2390] ss:$9 sm:$0xff] %v2293
    %2469 = vst [vmem:[%s2392] ss:$9 sm:$0xff] %v2294
    %2470 = vst [vmem:[%s2394] ss:$9 sm:$0xff] %v2295
    %2471 = vst [vmem:[%s2396] ss:$9 sm:$0xff] %v2296
    %2472 = vst [vmem:[%s2398] ss:$9 sm:$0xff] %v2297
    %2473 = vst [vmem:[%s2400] ss:$9 sm:$0xff] %v2298
    %v2474 = vld [vmem:[#allocation1] sm:$0xff]
    %2475 = vst [vmem:[#allocation1] ss:$9 sm:$0xff] %v2299
    %2476 = vst [vmem:[%s2388] ss:$9 sm:$0xff] %v2300
    %2477 = vst [vmem:[%s2390] ss:$9 sm:$0xff] %v2301
    %2478 = vst [vmem:[%s2392] ss:$9 sm:$0xff] %v2302
    %2479 = vst [vmem:[%s2394] ss:$9 sm:$0xff] %v2303
    %2480 = vst [vmem:[%s2396] ss:$9 sm:$0xff] %v2304
    %2481 = vst [vmem:[%s2398] ss:$9 sm:$0xff] %v2305
    %2482 = vst [vmem:[%s2400] ss:$9 sm:$0xff] %v2306
    %v2483 = vld [vmem:[#allocation1] sm:$0xff]
    %2484 = vst [vmem:[#allocation1] ss:$9 sm:$0xff] %v2307
    %2485 = vst [vmem:[%s2388] ss:$9 sm:$0xff] %v2308
    %2486 = vst [vmem:[%s2390] ss:$9 sm:$0xff] %v2309
    %2487 = vst [vmem:[%s2392] ss:$9 sm:$0xff] %v2310
    %2488 = vst [vmem:[%s2394] ss:$9 sm:$0xff] %v2311
    %2489 = vst [vmem:[%s2396] ss:$9 sm:$0xff] %v2312
    %2490 = vst [vmem:[%s2398] ss:$9 sm:$0xff] %v2313
    %2491 = vst [vmem:[%s2400] ss:$9 sm:$0xff] %v2314
    %v2492 = vld [vmem:[#allocation1] sm:$0xff]
    %2493 = vst [vmem:[#allocation1] ss:$9 sm:$0xff] %v2315
    %2494 = vst [vmem:[%s2388] ss:$9 sm:$0xff] %v2316
    %2495 = vst [vmem:[%s2390] ss:$9 sm:$0xff] %v2317
    %2496 = vst [vmem:[%s2392] ss:$9 sm:$0xff] %v2318
    %2497 = vst [vmem:[%s2394] ss:$9 sm:$0xff] %v2319
    %2498 = vst [vmem:[%s2396] ss:$9 sm:$0xff] %v2320
    %2499 = vst [vmem:[%s2398] ss:$9 sm:$0xff] %v2321
    %2500 = vst [vmem:[%s2400] ss:$9 sm:$0xff] %v2322
    %v2501 = vld [vmem:[#allocation1] sm:$0xff]
    %2502 = vst [vmem:[#allocation1] ss:$9 sm:$0xff] %v2323
    %2503 = vst [vmem:[%s2388] ss:$9 sm:$0xff] %v2324
    %2504 = vst [vmem:[%s2390] ss:$9 sm:$0xff] %v2325
    %2505 = vst [vmem:[%s2392] ss:$9 sm:$0xff] %v2326
    %2506 = vst [vmem:[%s2394] ss:$9 sm:$0xff] %v2327
    %2507 = vst [vmem:[%s2396] ss:$9 sm:$0xff] %v2328
    %2508 = vst [vmem:[%s2398] ss:$9 sm:$0xff] %v2329
    %2509 = vst [vmem:[%s2400] ss:$9 sm:$0xff] %v2330
    %v2510 = vld [vmem:[#allocation1] sm:$0xff]
    %2511 = vst [vmem:[#allocation1] ss:$9 sm:$0xff] %v2331
    %2512 = vst [vmem:[%s2388] ss:$9 sm:$0xff] %v2332
    %2513 = vst [vmem:[%s2390] ss:$9 sm:$0xff] %v2333
    %2514 = vst [vmem:[%s2392] ss:$9 sm:$0xff] %v2334
    %2515 = vst [vmem:[%s2394] ss:$9 sm:$0xff] %v2335
    %2516 = vst [vmem:[%s2396] ss:$9 sm:$0xff] %v2336
    %2517 = vst [vmem:[%s2398] ss:$9 sm:$0xff] %v2337
    %2518 = vst [vmem:[%s2400] ss:$9 sm:$0xff] %v2338
    %v2519 = vld [vmem:[#allocation1] sm:$0xff]
    %2520 = vst [vmem:[#allocation1] ss:$9 sm:$0xff] %v2339
    %2521 = vst [vmem:[%s2388] ss:$9 sm:$0xff] %v2340
    %2522 = vst [vmem:[%s2390] ss:$9 sm:$0xff] %v2341
    %2523 = vst [vmem:[%s2392] ss:$9 sm:$0xff] %v2342
    %2524 = vst [vmem:[%s2394] ss:$9 sm:$0xff] %v2343
    %2525 = vst [vmem:[%s2396] ss:$9 sm:$0xff] %v2344
    %2526 = vst [vmem:[%s2398] ss:$9 sm:$0xff] %v2345
    %2527 = vst [vmem:[%s2400] ss:$9 sm:$0xff] %v2346
    %v2528 = vld [vmem:[#allocation1] sm:$0xff]
    %2529 = vst [vmem:[#allocation1] ss:$9 sm:$0xff] %v2347
    %2530 = vst [vmem:[%s2388] ss:$9 sm:$0xff] %v2348
    %2531 = vst [vmem:[%s2390] ss:$9 sm:$0xff] %v2349
    %2532 = vst [vmem:[%s2392] ss:$9 sm:$0xff] %v2350
    %2533 = vst [vmem:[%s2394] ss:$9 sm:$0xff] %v2351
    %2534 = vst [vmem:[%s2396] ss:$9 sm:$0xff] %v2352
    %2535 = vst [vmem:[%s2398] ss:$9 sm:$0xff] %v2353
    %2536 = vst [vmem:[%s2400] ss:$9 sm:$0xff] %v2354
    %v2537 = vld [vmem:[#allocation1] sm:$0xff]
    %2538 = vst [vmem:[#allocation1] ss:$9 sm:$0xff] %v2355
    %2539 = vst [vmem:[%s2388] ss:$9 sm:$0xff] %v2356
    %2540 = vst [vmem:[%s2390] ss:$9 sm:$0xff] %v2357
    %2541 = vst [vmem:[%s2392] ss:$9 sm:$0xff] %v2358
    %2542 = vst [vmem:[%s2394] ss:$9 sm:$0xff] %v2359
    %2543 = vst [vmem:[%s2396] ss:$9 sm:$0xff] %v2360
    %2544 = vst [vmem:[%s2398] ss:$9 sm:$0xff] %v2361
    %2545 = vst [vmem:[%s2400] ss:$9 sm:$0xff] %v2362
    %v2546 = vld [vmem:[#allocation1] sm:$0xff]
    %2547 = vst [vmem:[#allocation1] ss:$9 sm:$0xff] %v2363
    %2548 = vst [vmem:[%s2388] ss:$9 sm:$0xff] %v2364
    %2549 = vst [vmem:[%s2390] ss:$9 sm:$0xff] %v2365
    %2550 = vst [vmem:[%s2392] ss:$9 sm:$0xff] %v2366
    %2551 = vst [vmem:[%s2394] ss:$9 sm:$0xff] %v2367
    %2552 = vst [vmem:[%s2396] ss:$9 sm:$0xff] %v2368
    %2553 = vst [vmem:[%s2398] ss:$9 sm:$0xff] %v2369
    %2554 = vst [vmem:[%s2400] ss:$9 sm:$0xff] %v2370
    %v2555 = vld [vmem:[#allocation1] sm:$0xff]
    %2556 = vst [vmem:[#allocation1] ss:$9 sm:$0xff] %v2371
    %2557 = vst [vmem:[%s2388] ss:$9 sm:$0xff] %v2372
    %2558 = vst [vmem:[%s2390] ss:$9 sm:$0xff] %v2373
    %2559 = vst [vmem:[%s2392] ss:$9 sm:$0xff] %v2374
    %2560 = vst [vmem:[%s2394] ss:$9 sm:$0xff] %v2375
    %2561 = vst [vmem:[%s2396] ss:$9 sm:$0xff] %v2376
    %2562 = vst [vmem:[%s2398] ss:$9 sm:$0xff] %v2377
    %2563 = vst [vmem:[%s2400] ss:$9 sm:$0xff] %v2378
    %v2564 = vld [vmem:[#allocation1] sm:$0xff]
    %2565 = vst [vmem:[#allocation1] ss:$9 sm:$0xff] %v2379
    %2566 = vst [vmem:[%s2388] ss:$9 sm:$0xff] %v2380
    %2567 = vst [vmem:[%s2390] ss:$9 sm:$0xff] %v2381
    %2568 = vst [vmem:[%s2392] ss:$9 sm:$0xff] %v2382
    %2569 = vst [vmem:[%s2394] ss:$9 sm:$0xff] %v2383
    %2570 = vst [vmem:[%s2396] ss:$9 sm:$0xff] %v2384
    %2571 = vst [vmem:[%s2398] ss:$9 sm:$0xff] %v2385
    %2572 = vst [vmem:[%s2400] ss:$9 sm:$0xff] %v2386
    %v2573 = vld [vmem:[#allocation1] sm:$0xff]
    %2574 = vset.pattern.permute.xlu0 0
    %2575 = vperm.xlu0 %2574, %v2402
    %v2576 = vpop.permute.xlu0 %2575
    %2577 = vset.pattern.permute.xlu0 0
    %2578 = vperm.xlu0 %2577, %v2411
    %v2579 = vpop.permute.xlu0 %2578
    %2580 = vset.pattern.permute.xlu0 0
    %2581 = vperm.xlu0 %2580, %v2420
    %v2582 = vpop.permute.xlu0 %2581
    %2583 = vset.pattern.permute.xlu0 0
    %2584 = vperm.xlu0 %2583, %v2429
    %v2585 = vpop.permute.xlu0 %2584
    %2586 = vset.pattern.permute.xlu0 0
    %2587 = vperm.xlu0 %2586, %v2438
    %v2588 = vpop.permute.xlu0 %2587
    %2589 = vset.pattern.permute.xlu0 0
    %2590 = vperm.xlu0 %2589, %v2447
    %v2591 = vpop.permute.xlu0 %2590
    %2592 = vset.pattern.permute.xlu0 0
    %2593 = vperm.xlu0 %2592, %v2456
    %v2594 = vpop.permute.xlu0 %2593
    %2595 = vset.pattern.permute.xlu0 0
    %2596 = vperm.xlu0 %2595, %v2465
    %v2597 = vpop.permute.xlu0 %2596
    %2598 = vset.pattern.permute.xlu0 0
    %2599 = vperm.xlu0 %2598, %v2474
    %v2600 = vpop.permute.xlu0 %2599
    %2601 = vset.pattern.permute.xlu0 0
    %2602 = vperm.xlu0 %2601, %v2483
    %v2603 = vpop.permute.xlu0 %2602
    %2604 = vset.pattern.permute.xlu0 0
    %2605 = vperm.xlu0 %2604, %v2492
    %v2606 = vpop.permute.xlu0 %2605
    %2607 = vset.pattern.permute.xlu0 0
    %2608 = vperm.xlu0 %2607, %v2501
    %v2609 = vpop.permute.xlu0 %2608
    %2610 = vset.pattern.permute.xlu0 0
    %2611 = vperm.xlu0 %2610, %v2510
    %v2612 = vpop.permute.xlu0 %2611
    %2613 = vset.pattern.permute.xlu0 0
    %2614 = vperm.xlu0 %2613, %v2519
    %v2615 = vpop.permute.xlu0 %2614
    %2616 = vset.pattern.permute.xlu0 0
    %2617 = vperm.xlu0 %2616, %v2528
    %v2618 = vpop.permute.xlu0 %2617
    %2619 = vset.pattern.permute.xlu0 0
    %2620 = vperm.xlu0 %2619, %v2537
    %v2621 = vpop.permute.xlu0 %2620
    %2622 = vset.pattern.permute.xlu0 0
    %2623 = vperm.xlu0 %2622, %v2546
    %v2624 = vpop.permute.xlu0 %2623
    %2625 = vset.pattern.permute.xlu0 0
    %2626 = vperm.xlu0 %2625, %v2555
    %v2627 = vpop.permute.xlu0 %2626
    %2628 = vset.pattern.permute.xlu0 0
    %2629 = vperm.xlu0 %2628, %v2564
    %v2630 = vpop.permute.xlu0 %2629
    %2631 = vset.pattern.permute.xlu0 0
    %2632 = vperm.xlu0 %2631, %v2573
    %v2633 = vpop.permute.xlu0 %2632
    %v2634 = vperm.slane %v2576, %v63
    %v2635 = vperm.slane %v2579, %v1501
    %v2636 = vsel %vm1503, %v2635, %v2634
    %v2637 = vperm.slane %v2582, %v1505
    %v2638 = vsel %vm1507, %v2637, %v2636
    %v2639 = vperm.slane %v2585, %v1509
    %v2640 = vsel %vm1511, %v2639, %v2638
    %v2641 = vperm.slane %v2588, %v1513
    %v2642 = vsel %vm1515, %v2641, %v2640
    %v2643 = vperm.slane %v2591, %v1517
    %v2644 = vsel %vm1519, %v2643, %v2642
    %v2645 = vperm.slane %v2594, %v1521
    %v2646 = vsel %vm1523, %v2645, %v2644
    %v2647 = vperm.slane %v2597, %v1525
    %v2648 = vsel %vm1527, %v2647, %v2646
    %v2649 = vperm.slane %v2600, %v1529
    %v2650 = vsel %vm1531, %v2649, %v2648
    %v2651 = vperm.slane %v2603, %v1533
    %v2652 = vsel %vm1535, %v2651, %v2650
    %v2653 = vperm.slane %v2606, %v1537
    %v2654 = vsel %vm1539, %v2653, %v2652
    %v2655 = vperm.slane %v2609, %v1541
    %v2656 = vsel %vm1543, %v2655, %v2654
    %v2657 = vperm.slane %v2612, %v1545
    %v2658 = vsel %vm1547, %v2657, %v2656
    %v2659 = vperm.slane %v2615, %v1549
    %v2660 = vsel %vm1551, %v2659, %v2658
    %v2661 = vperm.slane %v2618, %v1553
    %v2662 = vsel %vm1555, %v2661, %v2660
    %v2663 = vperm.slane %v2621, %v1557
    %v2664 = vsel %vm1559, %v2663, %v2662
    %v2665 = vperm.slane %v2624, %v63
    %v2666 = vperm.slane %v2627, %v1501
    %v2667 = vsel %vm1503, %v2666, %v2665
    %v2668 = vperm.slane %v2630, %v1505
    %v2669 = vsel %vm1507, %v2668, %v2667
    %v2670 = vperm.slane %v2633, %v1509
    %v2671 = vsel %vm1511, %v2670, %v2669
    %v2672 = vrot.slane %v2671, 7
    %v2673 = vsel %vm1569, %v2664, %v2672
    %s2675 = scalar_lea.vmem [#allocation8], 2
    %2676 = vst.msk [vmem:[%s2675] ss:$4 sm:$0x3] %vm1575, %v2673
    // Predicated region
    $region26: #{tpu_custom_call.1} parent=1 // pred_check
      _
    $region27: #{tpu_custom_call.1} parent=1 // pred_check_branch
      %2678 = sbr.rel (0) target = $region29
    $region28: #{tpu_custom_call.1} parent=1 // pred_region
      %2680 = vsyncadd [#allocation4], 0
      %s2682 = sshll.u32 [#allocation8], 4
      %s2683 = int_to_ptr.vmem [resolvable:$true] %s2682
      %s2684 = sshll.u32 %s3, 4
      %s2685 = int_to_ptr.hbm [resolvable:$true] %s2684
      %2687 = dma.vmem_to_hbm [thread:$0]  %s2683, 128, %s2685, [#allocation4]
    $region29: #{tpu_custom_call.1} parent=1 // pred_fallthru
      _
    // Predicated region
    $region30: #{tpu_custom_call.1} parent=1 // pred_check
      _
    $region31: #{tpu_custom_call.1} parent=1 // pred_check_branch
      %2689 = sbr.rel (0) target = $region33
    $region32: #{tpu_custom_call.1} parent=1 // pred_region
      %2691 = dma.done [#allocation4], 128
    $region33: #{tpu_custom_call.1} parent=1 // pred_fallthru
      _
    %2692 = vsyncpa [#allocation3], 1
    %2693 = vsyncpa [#allocation6], 1
    %2694 = vsyncpa [#allocation4], 1

</llo_original>
